<compile_context>
chip_gen: v7x
topology: tpu7x:2x2x1
jax: 0.10.0
libtpu: 0.0.40
codegen_flags: <defaults>
</compile_context>

<pallas_src>
import functools
import math

import jax
import jax.numpy as jnp
from jax.experimental import pallas as pl
from jax.experimental.pallas import tpu as pltpu


def _leaky(z, slope):
    # LeakyReLU(negative_slope=slope)
    return jnp.where(z >= 0, z, slope * z)


# ---------------------------------------------------------------------------
# Fused ResConv1DBlock kernel — one (L-tile, batch) grid point per invocation
# ---------------------------------------------------------------------------
def _resconv1d_block_kernel(xl_ref, xc_ref, xr_ref, w1_ref, b1_ref, w2_ref,
                            b2_ref, o_ref, *, dilation, tlh, tile_l, length,
                            slope, res_scale, compute_dtype):
    """
    xl_ref: (1, TLH, Cin)   left-halo rows  (act dtype)
    xc_ref: (1, TL,  Cin)   current tile    (act dtype)
    xr_ref: (1, TLH, Cin)   right-halo rows (act dtype)
    w1_ref: (3*Cin, Cst)    3-tap conv weight, taps stacked on K (compute dtype)
    b1_ref: (1, Cst)        conv1 bias (f32)
    w2_ref: (Cst, Cout)     1x1 conv weight (compute dtype)
    b2_ref: (1, Cout)       conv2 bias (f32)
    o_ref : (1, TL, Cout)   output tile (act dtype)
    """
    i = pl.program_id(0)                  # L-tile index (grid axis 0)
    num_tiles = pl.num_programs(0)

    xl = xl_ref[0]                        # (TLH, Cin)
    xc = xc_ref[0]                        # (TL,  Cin)
    xr = xr_ref[0]                        # (TLH, Cin)

    # Conv zero padding at the sequence ends: the left halo of the first tile
    # and the right halo of the last tile must read as zeros (their index maps
    # were clamped to stay in bounds, so mask here instead).
    xl = xl * jnp.where(i == 0, 0.0, 1.0).astype(xl.dtype)
    xr = xr * jnp.where(i == num_tiles - 1, 0.0, 1.0).astype(xr.dtype)

    # [left halo | tile | right halo]; single cast to the MXU compute dtype.
    window = jnp.concatenate([xl, xc, xr], axis=0).astype(compute_dtype)

    # conv1 (k=3, dilated): fuse the 3 taps into ONE matmul with K = 3*Cin.
    d = dilation
    base = tlh - d
    taps = jnp.concatenate(
        [window[base + k * d: base + k * d + tile_l, :] for k in range(3)],
        axis=1)                                          # (TL, 3*Cin)
    h = jnp.dot(taps, w1_ref[...], preferred_element_type=jnp.float32)
    h = _leaky(h + b1_ref[...], slope)                   # (TL, Cst), f32

    # conv2 (1x1) + LeakyReLU — intermediate never leaves VMEM/vregs.
    y = jnp.dot(h.astype(compute_dtype), w2_ref[...],
                preferred_element_type=jnp.float32) + b2_ref[...]
    y = _leaky(y, slope)

    # Residual add in f32 (bias/activation/residual all f32 in-kernel).
    if res_scale != 1.0:
        y = res_scale * y
    out = xc.astype(jnp.float32) + y

    # Maintain the "positions >= length are zero" invariant so the next
    # block's taps read correct conv zero padding from the blocked array.
    if length % tile_l != 0:
        pos = i * tile_l + jax.lax.broadcasted_iota(jnp.int32, out.shape, 0)
        out = jnp.where(pos < length, out, 0.0)

    o_ref[0] = out.astype(o_ref.dtype)


def _vmem_limit_bytes(tl, tlh, cin, cst, cout, act_dtype, compute_dtype):
    """Real double-buffered working set + in-kernel temporaries (+25%)."""
    ab = jnp.dtype(act_dtype).itemsize
    cb = jnp.dtype(compute_dtype).itemsize
    pipeline = (2 * tl * cin * ab                 # current tile (2 buffers)
                + 2 * 2 * tlh * cin * ab          # two halo views
                + 2 * tl * cout * ab              # output tile
                + 2 * 3 * cin * cst * cb          # w1 (constant index map)
                + 2 * cst * cout * cb             # w2
                + 4 * 8 * 128 * 4)                # biases (tile-padded)
    temps = ((tl + 2 * tlh) * cin * cb            # window
             + 3 * tl * cin * cb                  # tap concat
             + tl * cst * (4 + cb)                # h (f32) + compute copy
             + 2 * tl * cout * 4                  # y / residual sum (f32)
             + tl * cin * 4)                      # residual cast
    est = pipeline + temps
    return int(min(max(int(est * 1.25), 16 * 2 ** 20), 40 * 2 ** 20))


def _resconv1d_block(x_nlc, w1f, b1r, w2c, b2r, *, dilation, slope, res_scale,
                     tile_l, length, compute_dtype):
    """One fused ResConv1DBlock on a blocked (N, Lb, C) activation."""
    n, lb, cin = x_nlc.shape
    k3cin, cst = w1f.shape
    assert k3cin == 3 * cin
    cst_w, cout = w2c.shape
    assert cst_w == cst and cout == cin, "residual add requires conv2 out == n_in"
    d = int(dilation)
    tl = int(tile_l)

    # Halo block: multiple of 8, >= dilation, divides the tile.
    tlh = 8
    while tlh < d:
        tlh *= 2
    assert tl % tlh == 0, (tl, tlh)
    r = tl // tlh
    num_tiles = lb // tl
    nh = num_tiles * r                      # number of halo-sized blocks in Lb

    kern = functools.partial(
        _resconv1d_block_kernel, dilation=d, tlh=tlh, tile_l=tl, length=length,
        slope=float(slope), res_scale=float(res_scale),
        compute_dtype=compute_dtype)

    return pl.pallas_call(
        kern,
        out_shape=jax.ShapeDtypeStruct((n, lb, cout), x_nlc.dtype),
        grid_spec=pltpu.PrefetchScalarGridSpec(
            num_scalar_prefetch=0,
            grid=(num_tiles, n),            # long axis first (v7x megacore)
            in_specs=[
                # left halo: tile just before the current one (clamped at 0)
                pl.BlockSpec((1, tlh, cin),
                             lambda i, b: (b, jnp.maximum(i * r - 1, 0), 0)),
                # current L tile
                pl.BlockSpec((1, tl, cin), lambda i, b: (b, i, 0)),
                # right halo: tile just after (clamped at the last block)
                pl.BlockSpec((1, tlh, cin),
                             lambda i, b: (b, jnp.minimum((i + 1) * r, nh - 1), 0)),
                # weights / biases: constant index maps -> never re-DMA'd
                pl.BlockSpec((k3cin, cst), lambda i, b: (0, 0)),
                pl.BlockSpec((1, cst), lambda i, b: (0, 0)),
                pl.BlockSpec((cst, cout), lambda i, b: (0, 0)),
                pl.BlockSpec((1, cout), lambda i, b: (0, 0)),
            ],
            out_specs=pl.BlockSpec((1, tl, cout), lambda i, b: (b, i, 0)),
        ),
        compiler_params=pltpu.CompilerParams(
            dimension_semantics=("parallel", "parallel"),
            vmem_limit_bytes=_vmem_limit_bytes(tl, tlh, cin, cst, cout,
                                               x_nlc.dtype, compute_dtype),
        ),
    )(x_nlc, x_nlc, x_nlc, w1f, b1r, w2c, b2r)


# ---------------------------------------------------------------------------
# Resnet1D forward (stack of fused blocks; pad/block once for the whole stack)
# ---------------------------------------------------------------------------
def resnet1d_pallas(x_ncl, params, *, dilation_growth_rate=1, dilation_cycle=None,
                    reverse_dilation=False, res_scale=False, leaky_param=0.01,
                    tile_l=512, compute_dtype=jnp.bfloat16,
                    act_dtype=jnp.bfloat16):
    """Resnet1D forward. x_ncl is (N, C, L) like the PyTorch module."""
    n_depth = len(params)
    scale = 1.0 if not res_scale else 1.0 / math.sqrt(n_depth)
    order = list(range(n_depth))
    if reverse_dilation:
        order = order[::-1]

    dils = []
    for depth in order:
        exp = depth if dilation_cycle is None else depth % dilation_cycle
        dils.append(int(dilation_growth_rate ** exp))
    d_max = max(dils)

    # One tile geometry for the entire stack (covers the largest dilation).
    tlh_max = 8
    while tlh_max < d_max:
        tlh_max *= 2
    tl = max(int(tile_l), tlh_max)
    tl = ((tl + tlh_max - 1) // tlh_max) * tlh_max

    n, cin, length = x_ncl.shape
    num_tiles = -(-length // tl)
    lb = num_tiles * tl

    # NCL -> NLC once, pad/block once, cast to the inter-block activation dtype.
    x = jnp.transpose(x_ncl, (0, 2, 1))
    x = jnp.pad(x, ((0, 0), (0, lb - length), (0, 0))).astype(act_dtype)

    # Pre-cast / reshape all weights and biases once, outside the depth loop.
    prepped = []
    for depth in order:
        p = params[depth]
        cst = p["w1"].shape[-1]
        prepped.append((
            p["w1"].reshape(3 * cin, cst).astype(compute_dtype),   # taps on K
            p["b1"].reshape(1, cst).astype(jnp.float32),
            p["w2"].astype(compute_dtype),
            p["b2"].reshape(1, cin).astype(jnp.float32),
        ))

    for (w1f, b1r, w2c, b2r), dil in zip(prepped, dils):
        x = _resconv1d_block(x, w1f, b1r, w2c, b2r, dilation=dil,
                             slope=leaky_param, res_scale=scale, tile_l=tl,
                             length=length, compute_dtype=compute_dtype)

    # Slice back to the real length once, at the very end.
    x = x[:, :length, :].astype(x_ncl.dtype)
    return jnp.transpose(x, (0, 2, 1))


# ---------------------------------------------------------------------------
# Pure-JAX reference (true f32 semantics) for correctness
# ---------------------------------------------------------------------------
def resnet1d_ref(x_ncl, params, *, dilation_growth_rate=1, dilation_cycle=None,
                 reverse_dilation=False, res_scale=False, leaky_param=0.01):
    n_depth = len(params)
    scale = 1.0 if not res_scale else 1.0 / math.sqrt(n_depth)
    order = list(range(n_depth))
    if reverse_dilation:
        order = order[::-1]

    x = jnp.transpose(x_ncl, (0, 2, 1)).astype(jnp.float32)
    for depth in order:
        exp = depth if dilation_cycle is None else depth % dilation_cycle
        d = dilation_growth_rate ** exp
        p = params[depth]
        h = jax.lax.conv_general_dilated(
            x, p["w1"], window_strides=(1,), padding=[(d, d)],
            rhs_dilation=(d,), dimension_numbers=("NWC", "WIO", "NWC"),
            precision=jax.lax.Precision.HIGHEST) + p["b1"]
        h = _leaky(h, leaky_param)
        y = jax.lax.conv_general_dilated(
            h, p["w2"][None], window_strides=(1,), padding=[(0, 0)],
            dimension_numbers=("NWC", "WIO", "NWC"),
            precision=jax.lax.Precision.HIGHEST) + p["b2"]
        y = _leaky(y, leaky_param)
        x = x + scale * y
    return jnp.transpose(x, (0, 2, 1))


# ---------------------------------------------------------------------------
# Deterministic parameter init (shapes from ResConv1DBlock.__init__)
# ---------------------------------------------------------------------------
def init_params(key, n_in, n_state, n_depth):
    params = []
    for kd in jax.random.split(key, n_depth):
        k1, k2, k3, k4 = jax.random.split(kd, 4)
        params.append({
            "w1": 0.1 * jax.random.normal(k1, (3, n_in, n_state), jnp.float32),
            "b1": 0.1 * jax.random.normal(k2, (n_state,), jnp.float32),
            "w2": 0.1 * jax.random.normal(k3, (n_state, n_in), jnp.float32),
            "b2": 0.1 * jax.random.normal(k4, (n_in,), jnp.float32),
        })
    return params


if __name__ == "__main__":
    key = jax.random.PRNGKey(0)
    kx, kp = jax.random.split(key)

    batch, n_in, seq = 2, 16, 100          # seq not a multiple of the tile
    n_depth, m_conv = 2, 1.0
    n_state = int(m_conv * n_in)
    # dilation_growth_rate=3 -> block dilations 1 and 3 (exercises halo logic)
    cfg = dict(dilation_growth_rate=3, dilation_cycle=None,
               reverse_dilation=False, res_scale=False, leaky_param=0.01)

    x = jax.random.normal(kx, (batch, n_in, seq), jnp.float32)   # (N, C, L)
    params = init_params(kp, n_in, n_state, n_depth)

    # Small tiles + f32 everywhere: exercises multi-tile halos + output masking.
    run_f32 = jax.jit(lambda xx, pp: resnet1d_pallas(
        xx, pp, tile_l=32, compute_dtype=jnp.float32, act_dtype=jnp.float32,
        **cfg))
    # Default (production-style) config: big tiles, bf16 compute + bf16
    # inter-block activations.
    run_bf16 = jax.jit(lambda xx, pp: resnet1d_pallas(
        xx, pp, compute_dtype=jnp.bfloat16, act_dtype=jnp.bfloat16, **cfg))
    run_ref = jax.jit(lambda xx, pp: resnet1d_ref(xx, pp, **cfg))

    out_f32 = jax.block_until_ready(run_f32(x, params))
    out_bf16 = jax.block_until_ready(run_bf16(x, params))
    ref = jax.block_until_ready(run_ref(x, params))

    assert out_f32.shape == x.shape, out_f32.shape
    assert out_bf16.shape == x.shape, out_bf16.shape
    err_f32 = float(jnp.max(jnp.abs(out_f32 - ref)))
    err_bf16 = float(jnp.max(jnp.abs(out_bf16 - ref)))
    assert err_f32 < 3e-2, f"f32 path error too large: {err_f32}"
    assert err_bf16 < 2e-1, f"bf16 path error too large: {err_bf16}"
    print("KERNEL_OK")
</pallas_src>

<mosaic_0001>
module attributes {stable_mosaic.version = 11 : i64} {
  func.func @_resconv1d_block_kernel(%arg0: i32, %arg1: i32, %arg2: memref<1x8x16xf32, #tpu.memory_space<vmem>>, %arg3: memref<1x32x16xf32, #tpu.memory_space<vmem>>, %arg4: memref<1x8x16xf32, #tpu.memory_space<vmem>>, %arg5: memref<48x16xf32, #tpu.memory_space<vmem>>, %arg6: memref<1x16xf32, #tpu.memory_space<vmem>>, %arg7: memref<16x16xf32, #tpu.memory_space<vmem>>, %arg8: memref<1x16xf32, #tpu.memory_space<vmem>>, %arg9: memref<1x32x16xf32, #tpu.memory_space<vmem>>) attributes {dimension_semantics = [#tpu.dimension_semantics<parallel>, #tpu.dimension_semantics<parallel>], iteration_bounds = array<i64: 4, 2>, scalar_prefetch = 0 : i64, scratch_operands = 0 : i64, tpu.core_type = #tpu.core_type<tc>, window_params = [{transform_indices = @transform_0, window_bounds = array<i64: 1, 8, 16>}, {transform_indices = @transform_1, window_bounds = array<i64: 1, 32, 16>}, {transform_indices = @transform_2, window_bounds = array<i64: 1, 8, 16>}, {pipeline_mode = #tpu.pipeline_mode<synchronous>, transform_indices = @transform_3, window_bounds = array<i64: 48, 16>}, {pipeline_mode = #tpu.pipeline_mode<synchronous>, transform_indices = @transform_4, window_bounds = array<i64: 1, 16>}, {pipeline_mode = #tpu.pipeline_mode<synchronous>, transform_indices = @transform_5, window_bounds = array<i64: 16, 16>}, {pipeline_mode = #tpu.pipeline_mode<synchronous>, transform_indices = @transform_6, window_bounds = array<i64: 1, 16>}, {transform_indices = @transform_7, window_bounds = array<i64: 1, 32, 16>}]} {
    %c0 = arith.constant 0 : index
    %c0_0 = arith.constant 0 : index
    %c0_1 = arith.constant 0 : index
    %0 = vector.load %arg2[%c0, %c0_0, %c0_1] : memref<1x8x16xf32, #tpu.memory_space<vmem>>, vector<1x8x16xf32>
    %1 = vector.shape_cast %0 : vector<1x8x16xf32> to vector<8x16xf32>
    %c0_2 = arith.constant 0 : index
    %c0_3 = arith.constant 0 : index
    %c0_4 = arith.constant 0 : index
    %2 = vector.load %arg3[%c0_2, %c0_3, %c0_4] : memref<1x32x16xf32, #tpu.memory_space<vmem>>, vector<1x32x16xf32>
    %3 = vector.shape_cast %2 : vector<1x32x16xf32> to vector<32x16xf32>
    %c0_5 = arith.constant 0 : index
    %c0_6 = arith.constant 0 : index
    %c0_7 = arith.constant 0 : index
    %4 = vector.load %arg4[%c0_5, %c0_6, %c0_7] : memref<1x8x16xf32, #tpu.memory_space<vmem>>, vector<1x8x16xf32>
    %5 = vector.shape_cast %4 : vector<1x8x16xf32> to vector<8x16xf32>
    %c0_i32 = arith.constant 0 : i32
    %6 = arith.cmpi eq, %arg0, %c0_i32 : i32
    %cst = arith.constant 0.000000e+00 : f32
    %cst_8 = arith.constant 1.000000e+00 : f32
    %7 = arith.select %6, %cst, %cst_8 : f32
    %8 = vector.broadcast %7 : f32 to vector<8x16xf32>
    %9 = arith.mulf %1, %8 : vector<8x16xf32>
    %c3_i32 = arith.constant 3 : i32
    %10 = arith.cmpi eq, %arg0, %c3_i32 : i32
    %cst_9 = arith.constant 0.000000e+00 : f32
    %cst_10 = arith.constant 1.000000e+00 : f32
    %11 = arith.select %10, %cst_9, %cst_10 : f32
    %12 = vector.broadcast %11 : f32 to vector<8x16xf32>
    %13 = arith.mulf %5, %12 : vector<8x16xf32>
    %14 = tpu.concatenate %9, %3, %13 in 0 : vector<8x16xf32>, vector<32x16xf32>, vector<8x16xf32> -> vector<48x16xf32>
    %15 = vector.extract_strided_slice %14 {offsets = [7, 0], sizes = [32, 16], strides = [1, 1]} : vector<48x16xf32> to vector<32x16xf32>
    %16 = vector.extract_strided_slice %14 {offsets = [8, 0], sizes = [32, 16], strides = [1, 1]} : vector<48x16xf32> to vector<32x16xf32>
    %17 = vector.extract_strided_slice %14 {offsets = [9, 0], sizes = [32, 16], strides = [1, 1]} : vector<48x16xf32> to vector<32x16xf32>
    %18 = tpu.concatenate %15, %16, %17 in 1 : vector<32x16xf32>, vector<32x16xf32>, vector<32x16xf32> -> vector<32x48xf32>
    %c0_11 = arith.constant 0 : index
    %c0_12 = arith.constant 0 : index
    %19 = vector.load %arg5[%c0_11, %c0_12] : memref<48x16xf32, #tpu.memory_space<vmem>>, vector<48x16xf32>
    %cst_13 = arith.constant dense<0.000000e+00> : vector<32x16xf32>
    %20 = tpu.matmul %18, %19, %cst_13 {dimension_numbers = #tpu.dot_dimension_numbers<[1], [0], [0], [1], [0, 0, 1, 1], [], []>} : vector<32x48xf32>, vector<48x16xf32>, vector<32x16xf32> -> vector<32x16xf32>
    %c0_14 = arith.constant 0 : index
    %c0_15 = arith.constant 0 : index
    %21 = vector.load %arg6[%c0_14, %c0_15] : memref<1x16xf32, #tpu.memory_space<vmem>>, vector<1x16xf32>
    %22 = vector.broadcast %21 : vector<1x16xf32> to vector<32x16xf32>
    %23 = arith.addf %20, %22 : vector<32x16xf32>
    %cst_16 = arith.constant 0.000000e+00 : f32
    %24 = vector.broadcast %cst_16 : f32 to vector<32x16xf32>
    %25 = arith.cmpf oge, %23, %24 : vector<32x16xf32>
    %cst_17 = arith.constant 0.00999999977 : f32
    %26 = vector.broadcast %cst_17 : f32 to vector<32x16xf32>
    %27 = arith.mulf %26, %23 : vector<32x16xf32>
    %28 = arith.select %25, %23, %27 : vector<32x16xi1>, vector<32x16xf32>
    %c0_18 = arith.constant 0 : index
    %c0_19 = arith.constant 0 : index
    %29 = vector.load %arg7[%c0_18, %c0_19] : memref<16x16xf32, #tpu.memory_space<vmem>>, vector<16x16xf32>
    %cst_20 = arith.constant dense<0.000000e+00> : vector<32x16xf32>
    %30 = tpu.matmul %28, %29, %cst_20 {dimension_numbers = #tpu.dot_dimension_numbers<[1], [0], [0], [1], [0, 0, 1, 1], [], []>} : vector<32x16xf32>, vector<16x16xf32>, vector<32x16xf32> -> vector<32x16xf32>
    %c0_21 = arith.constant 0 : index
    %c0_22 = arith.constant 0 : index
    %31 = vector.load %arg8[%c0_21, %c0_22] : memref<1x16xf32, #tpu.memory_space<vmem>>, vector<1x16xf32>
    %32 = vector.broadcast %31 : vector<1x16xf32> to vector<32x16xf32>
    %33 = arith.addf %30, %32 : vector<32x16xf32>
    %cst_23 = arith.constant 0.000000e+00 : f32
    %34 = vector.broadcast %cst_23 : f32 to vector<32x16xf32>
    %35 = arith.cmpf oge, %33, %34 : vector<32x16xf32>
    %cst_24 = arith.constant 0.00999999977 : f32
    %36 = vector.broadcast %cst_24 : f32 to vector<32x16xf32>
    %37 = arith.mulf %36, %33 : vector<32x16xf32>
    %38 = arith.select %35, %33, %37 : vector<32x16xi1>, vector<32x16xf32>
    %39 = arith.addf %3, %38 : vector<32x16xf32>
    %c32_i32 = arith.constant 32 : i32
    %40 = arith.muli %arg0, %c32_i32 : i32
    %41 = tpu.iota {dimensions = array<i32: 0>} : vector<32x16xi32>
    %42 = vector.broadcast %40 : i32 to vector<32x16xi32>
    %43 = arith.addi %42, %41 : vector<32x16xi32>
    %c100_i32 = arith.constant 100 : i32
    %44 = vector.broadcast %c100_i32 : i32 to vector<32x16xi32>
    %45 = arith.cmpi slt, %43, %44 : vector<32x16xi32>
    %cst_25 = arith.constant 0.000000e+00 : f32
    %46 = vector.broadcast %cst_25 : f32 to vector<32x16xf32>
    %47 = arith.select %45, %39, %46 : vector<32x16xi1>, vector<32x16xf32>
    %c0_26 = arith.constant 0 : index
    %c0_27 = arith.constant 0 : index
    %c0_28 = arith.constant 0 : index
    %48 = vector.load %arg9[%c0_26, %c0_27, %c0_28] : memref<1x32x16xf32, #tpu.memory_space<vmem>>, vector<1x32x16xf32>
    %49 = vector.shape_cast %48 : vector<1x32x16xf32> to vector<32x16xf32>
    %50 = vector.shape_cast %47 : vector<32x16xf32> to vector<1x32x16xf32>
    tpu.vector_store %arg9[%c0_26, %c0_27, %c0_28], %50 {strides = array<i32>} : memref<1x32x16xf32, #tpu.memory_space<vmem>>, vector<1x32x16xf32>,
    return
  }
  func.func @transform_0(%arg0: i32, %arg1: i32) -> (i32, i32, i32) {
    %c4_i32 = arith.constant 4 : i32
    %0 = arith.muli %arg0, %c4_i32 : i32
    %c1_i32 = arith.constant 1 : i32
    %1 = arith.subi %0, %c1_i32 : i32
    %c0_i32 = arith.constant 0 : i32
    %2 = arith.maxsi %1, %c0_i32 : i32
    %c0_i32_0 = arith.constant 0 : i32
    %c0_i32_1 = arith.constant 0 : i32
    return %arg1, %2, %c0_i32_0 : i32, i32, i32
  }
  func.func @transform_1(%arg0: i32, %arg1: i32) -> (i32, i32, i32) {
    %c0_i32 = arith.constant 0 : i32
    %c0_i32_0 = arith.constant 0 : i32
    return %arg1, %arg0, %c0_i32 : i32, i32, i32
  }
  func.func @transform_2(%arg0: i32, %arg1: i32) -> (i32, i32, i32) {
    %c1_i32 = arith.constant 1 : i32
    %0 = arith.addi %arg0, %c1_i32 : i32
    %c4_i32 = arith.constant 4 : i32
    %1 = arith.muli %0, %c4_i32 : i32
    %c15_i32 = arith.constant 15 : i32
    %2 = arith.minsi %1, %c15_i32 : i32
    %c0_i32 = arith.constant 0 : i32
    %c0_i32_0 = arith.constant 0 : i32
    return %arg1, %2, %c0_i32 : i32, i32, i32
  }
  func.func @transform_3(%arg0: i32, %arg1: i32) -> (i32, i32) {
    %c0_i32 = arith.constant 0 : i32
    %c0_i32_0 = arith.constant 0 : i32
    %c0_i32_1 = arith.constant 0 : i32
    return %c0_i32, %c0_i32_0 : i32, i32
  }
  func.func @transform_4(%arg0: i32, %arg1: i32) -> (i32, i32) {
    %c0_i32 = arith.constant 0 : i32
    %c0_i32_0 = arith.constant 0 : i32
    %c0_i32_1 = arith.constant 0 : i32
    return %c0_i32, %c0_i32_0 : i32, i32
  }
  func.func @transform_5(%arg0: i32, %arg1: i32) -> (i32, i32) {
    %c0_i32 = arith.constant 0 : i32
    %c0_i32_0 = arith.constant 0 : i32
    %c0_i32_1 = arith.constant 0 : i32
    return %c0_i32, %c0_i32_0 : i32, i32
  }
  func.func @transform_6(%arg0: i32, %arg1: i32) -> (i32, i32) {
    %c0_i32 = arith.constant 0 : i32
    %c0_i32_0 = arith.constant 0 : i32
    %c0_i32_1 = arith.constant 0 : i32
    return %c0_i32, %c0_i32_0 : i32, i32
  }
  func.func @transform_7(%arg0: i32, %arg1: i32) -> (i32, i32, i32) {
    %c0_i32 = arith.constant 0 : i32
    %c0_i32_0 = arith.constant 0 : i32
    return %arg1, %arg0, %c0_i32 : i32, i32, i32
  }
}

module attributes {stable_mosaic.version = 11 : i64} {
  func.func @_resconv1d_block_kernel(%arg0: i32, %arg1: i32, %arg2: memref<1x8x16xf32, #tpu.memory_space<vmem>>, %arg3: memref<1x32x16xf32, #tpu.memory_space<vmem>>, %arg4: memref<1x8x16xf32, #tpu.memory_space<vmem>>, %arg5: memref<48x16xf32, #tpu.memory_space<vmem>>, %arg6: memref<1x16xf32, #tpu.memory_space<vmem>>, %arg7: memref<16x16xf32, #tpu.memory_space<vmem>>, %arg8: memref<1x16xf32, #tpu.memory_space<vmem>>, %arg9: memref<1x32x16xf32, #tpu.memory_space<vmem>>) attributes {dimension_semantics = [#tpu.dimension_semantics<parallel>, #tpu.dimension_semantics<parallel>], iteration_bounds = array<i64: 4, 2>, scalar_prefetch = 0 : i64, scratch_operands = 0 : i64, tpu.core_type = #tpu.core_type<tc>, window_params = [{transform_indices = @transform_0, window_bounds = array<i64: 1, 8, 16>}, {transform_indices = @transform_1, window_bounds = array<i64: 1, 32, 16>}, {transform_indices = @transform_2, window_bounds = array<i64: 1, 8, 16>}, {pipeline_mode = #tpu.pipeline_mode<synchronous>, transform_indices = @transform_3, window_bounds = array<i64: 48, 16>}, {pipeline_mode = #tpu.pipeline_mode<synchronous>, transform_indices = @transform_4, window_bounds = array<i64: 1, 16>}, {pipeline_mode = #tpu.pipeline_mode<synchronous>, transform_indices = @transform_5, window_bounds = array<i64: 16, 16>}, {pipeline_mode = #tpu.pipeline_mode<synchronous>, transform_indices = @transform_6, window_bounds = array<i64: 1, 16>}, {transform_indices = @transform_7, window_bounds = array<i64: 1, 32, 16>}]} {
    %c0 = arith.constant 0 : index
    %c0_0 = arith.constant 0 : index
    %c0_1 = arith.constant 0 : index
    %0 = vector.load %arg2[%c0, %c0_0, %c0_1] : memref<1x8x16xf32, #tpu.memory_space<vmem>>, vector<1x8x16xf32>
    %1 = vector.shape_cast %0 : vector<1x8x16xf32> to vector<8x16xf32>
    %c0_2 = arith.constant 0 : index
    %c0_3 = arith.constant 0 : index
    %c0_4 = arith.constant 0 : index
    %2 = vector.load %arg3[%c0_2, %c0_3, %c0_4] : memref<1x32x16xf32, #tpu.memory_space<vmem>>, vector<1x32x16xf32>
    %3 = vector.shape_cast %2 : vector<1x32x16xf32> to vector<32x16xf32>
    %c0_5 = arith.constant 0 : index
    %c0_6 = arith.constant 0 : index
    %c0_7 = arith.constant 0 : index
    %4 = vector.load %arg4[%c0_5, %c0_6, %c0_7] : memref<1x8x16xf32, #tpu.memory_space<vmem>>, vector<1x8x16xf32>
    %5 = vector.shape_cast %4 : vector<1x8x16xf32> to vector<8x16xf32>
    %c0_i32 = arith.constant 0 : i32
    %6 = arith.cmpi eq, %arg0, %c0_i32 : i32
    %cst = arith.constant 0.000000e+00 : f32
    %cst_8 = arith.constant 1.000000e+00 : f32
    %7 = arith.select %6, %cst, %cst_8 : f32
    %8 = vector.broadcast %7 : f32 to vector<8x16xf32>
    %9 = arith.mulf %1, %8 : vector<8x16xf32>
    %c3_i32 = arith.constant 3 : i32
    %10 = arith.cmpi eq, %arg0, %c3_i32 : i32
    %cst_9 = arith.constant 0.000000e+00 : f32
    %cst_10 = arith.constant 1.000000e+00 : f32
    %11 = arith.select %10, %cst_9, %cst_10 : f32
    %12 = vector.broadcast %11 : f32 to vector<8x16xf32>
    %13 = arith.mulf %5, %12 : vector<8x16xf32>
    %14 = tpu.concatenate %9, %3, %13 in 0 : vector<8x16xf32>, vector<32x16xf32>, vector<8x16xf32> -> vector<48x16xf32>
    %15 = vector.extract_strided_slice %14 {offsets = [5, 0], sizes = [32, 16], strides = [1, 1]} : vector<48x16xf32> to vector<32x16xf32>
    %16 = vector.extract_strided_slice %14 {offsets = [8, 0], sizes = [32, 16], strides = [1, 1]} : vector<48x16xf32> to vector<32x16xf32>
    %17 = vector.extract_strided_slice %14 {offsets = [11, 0], sizes = [32, 16], strides = [1, 1]} : vector<48x16xf32> to vector<32x16xf32>
    %18 = tpu.concatenate %15, %16, %17 in 1 : vector<32x16xf32>, vector<32x16xf32>, vector<32x16xf32> -> vector<32x48xf32>
    %c0_11 = arith.constant 0 : index
    %c0_12 = arith.constant 0 : index
    %19 = vector.load %arg5[%c0_11, %c0_12] : memref<48x16xf32, #tpu.memory_space<vmem>>, vector<48x16xf32>
    %cst_13 = arith.constant dense<0.000000e+00> : vector<32x16xf32>
    %20 = tpu.matmul %18, %19, %cst_13 {dimension_numbers = #tpu.dot_dimension_numbers<[1], [0], [0], [1], [0, 0, 1, 1], [], []>} : vector<32x48xf32>, vector<48x16xf32>, vector<32x16xf32> -> vector<32x16xf32>
    %c0_14 = arith.constant 0 : index
    %c0_15 = arith.constant 0 : index
    %21 = vector.load %arg6[%c0_14, %c0_15] : memref<1x16xf32, #tpu.memory_space<vmem>>, vector<1x16xf32>
    %22 = vector.broadcast %21 : vector<1x16xf32> to vector<32x16xf32>
    %23 = arith.addf %20, %22 : vector<32x16xf32>
    %cst_16 = arith.constant 0.000000e+00 : f32
    %24 = vector.broadcast %cst_16 : f32 to vector<32x16xf32>
    %25 = arith.cmpf oge, %23, %24 : vector<32x16xf32>
    %cst_17 = arith.constant 0.00999999977 : f32
    %26 = vector.broadcast %cst_17 : f32 to vector<32x16xf32>
    %27 = arith.mulf %26, %23 : vector<32x16xf32>
    %28 = arith.select %25, %23, %27 : vector<32x16xi1>, vector<32x16xf32>
    %c0_18 = arith.constant 0 : index
    %c0_19 = arith.constant 0 : index
    %29 = vector.load %arg7[%c0_18, %c0_19] : memref<16x16xf32, #tpu.memory_space<vmem>>, vector<16x16xf32>
    %cst_20 = arith.constant dense<0.000000e+00> : vector<32x16xf32>
    %30 = tpu.matmul %28, %29, %cst_20 {dimension_numbers = #tpu.dot_dimension_numbers<[1], [0], [0], [1], [0, 0, 1, 1], [], []>} : vector<32x16xf32>, vector<16x16xf32>, vector<32x16xf32> -> vector<32x16xf32>
    %c0_21 = arith.constant 0 : index
    %c0_22 = arith.constant 0 : index
    %31 = vector.load %arg8[%c0_21, %c0_22] : memref<1x16xf32, #tpu.memory_space<vmem>>, vector<1x16xf32>
    %32 = vector.broadcast %31 : vector<1x16xf32> to vector<32x16xf32>
    %33 = arith.addf %30, %32 : vector<32x16xf32>
    %cst_23 = arith.constant 0.000000e+00 : f32
    %34 = vector.broadcast %cst_23 : f32 to vector<32x16xf32>
    %35 = arith.cmpf oge, %33, %34 : vector<32x16xf32>
    %cst_24 = arith.constant 0.00999999977 : f32
    %36 = vector.broadcast %cst_24 : f32 to vector<32x16xf32>
    %37 = arith.mulf %36, %33 : vector<32x16xf32>
    %38 = arith.select %35, %33, %37 : vector<32x16xi1>, vector<32x16xf32>
    %39 = arith.addf %3, %38 : vector<32x16xf32>
    %c32_i32 = arith.constant 32 : i32
    %40 = arith.muli %arg0, %c32_i32 : i32
    %41 = tpu.iota {dimensions = array<i32: 0>} : vector<32x16xi32>
    %42 = vector.broadcast %40 : i32 to vector<32x16xi32>
    %43 = arith.addi %42, %41 : vector<32x16xi32>
    %c100_i32 = arith.constant 100 : i32
    %44 = vector.broadcast %c100_i32 : i32 to vector<32x16xi32>
    %45 = arith.cmpi slt, %43, %44 : vector<32x16xi32>
    %cst_25 = arith.constant 0.000000e+00 : f32
    %46 = vector.broadcast %cst_25 : f32 to vector<32x16xf32>
    %47 = arith.select %45, %39, %46 : vector<32x16xi1>, vector<32x16xf32>
    %c0_26 = arith.constant 0 : index
    %c0_27 = arith.constant 0 : index
    %c0_28 = arith.constant 0 : index
    %48 = vector.load %arg9[%c0_26, %c0_27, %c0_28] : memref<1x32x16xf32, #tpu.memory_space<vmem>>, vector<1x32x16xf32>
    %49 = vector.shape_cast %48 : vector<1x32x16xf32> to vector<32x16xf32>
    %50 = vector.shape_cast %47 : vector<32x16xf32> to vector<1x32x16xf32>
    tpu.vector_store %arg9[%c0_26, %c0_27, %c0_28], %50 {strides = array<i32>} : memref<1x32x16xf32, #tpu.memory_space<vmem>>, vector<1x32x16xf32>,
    return
  }
  func.func @transform_0(%arg0: i32, %arg1: i32) -> (i32, i32, i32) {
    %c4_i32 = arith.constant 4 : i32
    %0 = arith.muli %arg0, %c4_i32 : i32
    %c1_i32 = arith.constant 1 : i32
    %1 = arith.subi %0, %c1_i32 : i32
    %c0_i32 = arith.constant 0 : i32
    %2 = arith.maxsi %1, %c0_i32 : i32
    %c0_i32_0 = arith.constant 0 : i32
    %c0_i32_1 = arith.constant 0 : i32
    return %arg1, %2, %c0_i32_0 : i32, i32, i32
  }
  func.func @transform_1(%arg0: i32, %arg1: i32) -> (i32, i32, i32) {
    %c0_i32 = arith.constant 0 : i32
    %c0_i32_0 = arith.constant 0 : i32
    return %arg1, %arg0, %c0_i32 : i32, i32, i32
  }
  func.func @transform_2(%arg0: i32, %arg1: i32) -> (i32, i32, i32) {
    %c1_i32 = arith.constant 1 : i32
    %0 = arith.addi %arg0, %c1_i32 : i32
    %c4_i32 = arith.constant 4 : i32
    %1 = arith.muli %0, %c4_i32 : i32
    %c15_i32 = arith.constant 15 : i32
    %2 = arith.minsi %1, %c15_i32 : i32
    %c0_i32 = arith.constant 0 : i32
    %c0_i32_0 = arith.constant 0 : i32
    return %arg1, %2, %c0_i32 : i32, i32, i32
  }
  func.func @transform_3(%arg0: i32, %arg1: i32) -> (i32, i32) {
    %c0_i32 = arith.constant 0 : i32
    %c0_i32_0 = arith.constant 0 : i32
    %c0_i32_1 = arith.constant 0 : i32
    return %c0_i32, %c0_i32_0 : i32, i32
  }
  func.func @transform_4(%arg0: i32, %arg1: i32) -> (i32, i32) {
    %c0_i32 = arith.constant 0 : i32
    %c0_i32_0 = arith.constant 0 : i32
    %c0_i32_1 = arith.constant 0 : i32
    return %c0_i32, %c0_i32_0 : i32, i32
  }
  func.func @transform_5(%arg0: i32, %arg1: i32) -> (i32, i32) {
    %c0_i32 = arith.constant 0 : i32
    %c0_i32_0 = arith.constant 0 : i32
    %c0_i32_1 = arith.constant 0 : i32
    return %c0_i32, %c0_i32_0 : i32, i32
  }
  func.func @transform_6(%arg0: i32, %arg1: i32) -> (i32, i32) {
    %c0_i32 = arith.constant 0 : i32
    %c0_i32_0 = arith.constant 0 : i32
    %c0_i32_1 = arith.constant 0 : i32
    return %c0_i32, %c0_i32_0 : i32, i32
  }
  func.func @transform_7(%arg0: i32, %arg1: i32) -> (i32, i32, i32) {
    %c0_i32 = arith.constant 0 : i32
    %c0_i32_0 = arith.constant 0 : i32
    return %arg1, %arg0, %c0_i32 : i32, i32, i32
  }
}

</mosaic_0001>

<llo_original>
// kernel: _lambda_.2
$region0: #{_lambda_.2}
  #allocation0 [shape = 'u32[]', space=smem, size = 0x4, offset = 0x4, fixed_abs, tag = 'smem constant byte address 0x4 - core index']
  #allocation1 [shape = 'u32[144,128]{1,0:T(1,128)}', space=vmem, size = 0x12000, scoped, tag = 'internal scratch']
  %s0 = inlined_call_operand.vmem [shape: f32[2,128,16], index: 0, kind: input, shape index: {}, may-alias: {0,1,2}]
  %s1 = inlined_call_operand.vmem [shape: f32[2,128,16], index: 1, kind: input, shape index: {}, may-alias: {0,1,2}]
  %s2 = inlined_call_operand.vmem [shape: f32[2,128,16], index: 2, kind: input, shape index: {}, may-alias: {0,1,2}]
  %s3 = inlined_call_operand.vmem [shape: f32[48,16], index: 3, kind: input, shape index: {}]
  %s4 = inlined_call_operand.vmem [shape: f32[1,16], index: 4, kind: input, shape index: {}]
  %s5 = inlined_call_operand.vmem [shape: f32[16,16], index: 5, kind: input, shape index: {}]
  %s6 = inlined_call_operand.vmem [shape: f32[1,16], index: 6, kind: input, shape index: {}]
  %s7 = inlined_call_operand.vmem [shape: f32[2,128,16], index: 7, kind: output, shape index: {}]
  %s8 = sld [smem:[#allocation0]]
  $region61: #{_lambda_.2} parent=0
    _
  %s10 = ssub.s32 1, %s8
  %s11 = scalar_select 0, %s10, %s8
  loop: start=0, step=1, limit=10
  $region2: #{_lambda_.2} parent=0 // loop_pre_header
    _
  $region3: #{_lambda_.2} parent=0 // loop_header
    %s13 = sphi 0, %s17
    %p14 = scmp.ge.s32.totalorder %s13, 10
    %s20 = sphi 0, %s32
    %s21 = sphi 0, %s28
    %s22 = sphi 0, %s20
    %s23 = sphi 0, %s21
    %s24 = sphi 0, %s22
    %s25 = sphi 0, %s23
    %s45 = sphi 0, %s47
    %s48 = sphi 0, %s45
    %s49 = sphi 0, %s48
    %s65 = sphi 0, %s49
    %s73 = sphi 0, %s75
    %s76 = sphi 0, %s73
    %s77 = sphi 0, %s76
    %s93 = sphi 0, %s77
    %s109 = sphi 0, %s111
    %s112 = sphi 0, %s109
    %s113 = sphi 0, %s112
    %s129 = sphi 0, %s113
    %s133 = sphi 0, %s133
    %s135 = sphi 0, %s133
    %s136 = sphi 0, %s135
    %s150 = sphi 0, %s136
    %s154 = sphi 0, %s154
    %s156 = sphi 0, %s154
    %s157 = sphi 0, %s156
    %s171 = sphi 0, %s157
    %s175 = sphi 0, %s175
    %s177 = sphi 0, %s175
    %s178 = sphi 0, %s177
    %s192 = sphi 0, %s178
    %s196 = sphi 0, %s196
    %s198 = sphi 0, %s196
    %s199 = sphi 0, %s198
    %s213 = sphi 0, %s199
    %s221 = sphi 0, %s223
    %s224 = sphi 0, %s221
    %s225 = sphi 0, %s224
    %s241 = sphi 0, %s225
  $region4: #{_lambda_.2} parent=0 // loop_header_branch
    %16 = sbr.rel (%p14) target = $region8
  $region5: #{_lambda_.2} parent=0 // loop_body
    %s18 = ssub.s32 %s13, 1
    %s19 = ssub.s32 %s13, 2
    %s26 = sadd.s32 1, %s21
    %p27 = scmp.ge.s32.totalorder %s26, 2
    %s28 = scalar_select %p27, 0, %s26
    %s29 = sadd.s32 1, %s20
    %s30 = scalar_select %p27, %s29, %s20
    %p31 = scmp.ge.s32.totalorder %s30, 4
    %s32 = scalar_select %p31, 0, %s30
    %s33 = smul.u32 %s20, 4
    %s34 = ssub.s32 %s33, 1
    %p35 = scmp.gt.s32.totalorder %s34, 0
    %s36 = scalar_select %p35, %s34, 0
    %s37 = smul.u32 %s32, 4
    %s38 = ssub.s32 %s37, 1
    %p39 = scmp.gt.s32.totalorder %s38, 0
    %s40 = scalar_select %p39, %s38, 0
    %s41 = ssub.s32 %s21, %s28
    %s42 = ssub.s32 %s36, %s40
    %s43 = sor.u32 %s41, %s42
    %p44 = scmp.eq.s32.totalorder %s43, 0
    %s46 = sadd.s32 %s45, 1
    %s47 = scalar_select %p44, %s45, %s46
    %p50 = pneg %p44
    %p51 = scmp.eq.s32.totalorder %s13, 7
    %p52 = por %p50, %p51
    %p53 = scmp.ne.s32.totalorder %s45, %s48
    %p54 = scmp.eq.s32.totalorder %s13, 0
    %p55 = por %p53, %p54
    %p56 = scmp.ne.s32.totalorder %s45, %s48
    %p57 = scmp.eq.s32.totalorder %s18, 7
    %p58 = por %p56, %p57
    %p59 = scmp.ne.s32.totalorder %s48, %s49
    %p60 = scmp.eq.s32.totalorder %s18, 0
    %p61 = por %p59, %p60
    %p62 = scmp.ne.s32.totalorder %s48, %s49
    %p63 = scmp.eq.s32.totalorder %s19, 7
    %p64 = por %p62, %p63
    %p66 = scmp.ne.s32.totalorder %s49, %s65
    %p67 = scmp.eq.s32.totalorder %s19, 0
    %p68 = por %p66, %p67
    %s69 = ssub.s32 %s21, %s28
    %s70 = ssub.s32 %s20, %s32
    %s71 = sor.u32 %s69, %s70
    %p72 = scmp.eq.s32.totalorder %s71, 0
    %s74 = sadd.s32 %s73, 1
    %s75 = scalar_select %p72, %s73, %s74
    %p78 = pneg %p72
    %p79 = scmp.eq.s32.totalorder %s13, 7
    %p80 = por %p78, %p79
    %p81 = scmp.ne.s32.totalorder %s73, %s76
    %p82 = scmp.eq.s32.totalorder %s13, 0
    %p83 = por %p81, %p82
    %p84 = scmp.ne.s32.totalorder %s73, %s76
    %p85 = scmp.eq.s32.totalorder %s18, 7
    %p86 = por %p84, %p85
    %p87 = scmp.ne.s32.totalorder %s76, %s77
    %p88 = scmp.eq.s32.totalorder %s18, 0
    %p89 = por %p87, %p88
    %p90 = scmp.ne.s32.totalorder %s76, %s77
    %p91 = scmp.eq.s32.totalorder %s19, 7
    %p92 = por %p90, %p91
    %p94 = scmp.ne.s32.totalorder %s77, %s93
    %p95 = scmp.eq.s32.totalorder %s19, 0
    %p96 = por %p94, %p95
    %s97 = sadd.s32 %s20, 1
    %s98 = smul.u32 %s97, 4
    %p99 = scmp.lt.s32.totalorder %s98, 15
    %s100 = scalar_select %p99, %s98, 15
    %s101 = sadd.s32 %s32, 1
    %s102 = smul.u32 %s101, 4
    %p103 = scmp.lt.s32.totalorder %s102, 15
    %s104 = scalar_select %p103, %s102, 15
    %s105 = ssub.s32 %s21, %s28
    %s106 = ssub.s32 %s100, %s104
    %s107 = sor.u32 %s105, %s106
    %p108 = scmp.eq.s32.totalorder %s107, 0
    %s110 = sadd.s32 %s109, 1
    %s111 = scalar_select %p108, %s109, %s110
    %p114 = pneg %p108
    %p115 = scmp.eq.s32.totalorder %s13, 7
    %p116 = por %p114, %p115
    %p117 = scmp.ne.s32.totalorder %s109, %s112
    %p118 = scmp.eq.s32.totalorder %s13, 0
    %p119 = por %p117, %p118
    %p120 = scmp.ne.s32.totalorder %s109, %s112
    %p121 = scmp.eq.s32.totalorder %s18, 7
    %p122 = por %p120, %p121
    %p123 = scmp.ne.s32.totalorder %s112, %s113
    %p124 = scmp.eq.s32.totalorder %s18, 0
    %p125 = por %p123, %p124
    %p126 = scmp.ne.s32.totalorder %s112, %s113
    %p127 = scmp.eq.s32.totalorder %s19, 7
    %p128 = por %p126, %p127
    %p130 = scmp.ne.s32.totalorder %s113, %s129
    %p131 = scmp.eq.s32.totalorder %s19, 0
    %p132 = por %p130, %p131
    %s134 = sadd.s32 %s133, 1
    %p137 = scmp.eq.s32.totalorder %s13, 7
    %p138 = scmp.ne.s32.totalorder %s133, %s135
    %p139 = scmp.eq.s32.totalorder %s13, 0
    %p140 = por %p138, %p139
    %p141 = scmp.ne.s32.totalorder %s133, %s135
    %p142 = scmp.eq.s32.totalorder %s18, 7
    %p143 = por %p141, %p142
    %p144 = scmp.ne.s32.totalorder %s135, %s136
    %p145 = scmp.eq.s32.totalorder %s18, 0
    %p146 = por %p144, %p145
    %p147 = scmp.ne.s32.totalorder %s135, %s136
    %p148 = scmp.eq.s32.totalorder %s19, 7
    %p149 = por %p147, %p148
    %p151 = scmp.ne.s32.totalorder %s136, %s150
    %p152 = scmp.eq.s32.totalorder %s19, 0
    %p153 = por %p151, %p152
    %s155 = sadd.s32 %s154, 1
    %p158 = scmp.eq.s32.totalorder %s13, 7
    %p159 = scmp.ne.s32.totalorder %s154, %s156
    %p160 = scmp.eq.s32.totalorder %s13, 0
    %p161 = por %p159, %p160
    %p162 = scmp.ne.s32.totalorder %s154, %s156
    %p163 = scmp.eq.s32.totalorder %s18, 7
    %p164 = por %p162, %p163
    %p165 = scmp.ne.s32.totalorder %s156, %s157
    %p166 = scmp.eq.s32.totalorder %s18, 0
    %p167 = por %p165, %p166
    %p168 = scmp.ne.s32.totalorder %s156, %s157
    %p169 = scmp.eq.s32.totalorder %s19, 7
    %p170 = por %p168, %p169
    %p172 = scmp.ne.s32.totalorder %s157, %s171
    %p173 = scmp.eq.s32.totalorder %s19, 0
    %p174 = por %p172, %p173
    %s176 = sadd.s32 %s175, 1
    %p179 = scmp.eq.s32.totalorder %s13, 7
    %p180 = scmp.ne.s32.totalorder %s175, %s177
    %p181 = scmp.eq.s32.totalorder %s13, 0
    %p182 = por %p180, %p181
    %p183 = scmp.ne.s32.totalorder %s175, %s177
    %p184 = scmp.eq.s32.totalorder %s18, 7
    %p185 = por %p183, %p184
    %p186 = scmp.ne.s32.totalorder %s177, %s178
    %p187 = scmp.eq.s32.totalorder %s18, 0
    %p188 = por %p186, %p187
    %p189 = scmp.ne.s32.totalorder %s177, %s178
    %p190 = scmp.eq.s32.totalorder %s19, 7
    %p191 = por %p189, %p190
    %p193 = scmp.ne.s32.totalorder %s178, %s192
    %p194 = scmp.eq.s32.totalorder %s19, 0
    %p195 = por %p193, %p194
    %s197 = sadd.s32 %s196, 1
    %p200 = scmp.eq.s32.totalorder %s13, 7
    %p201 = scmp.ne.s32.totalorder %s196, %s198
    %p202 = scmp.eq.s32.totalorder %s13, 0
    %p203 = por %p201, %p202
    %p204 = scmp.ne.s32.totalorder %s196, %s198
    %p205 = scmp.eq.s32.totalorder %s18, 7
    %p206 = por %p204, %p205
    %p207 = scmp.ne.s32.totalorder %s198, %s199
    %p208 = scmp.eq.s32.totalorder %s18, 0
    %p209 = por %p207, %p208
    %p210 = scmp.ne.s32.totalorder %s198, %s199
    %p211 = scmp.eq.s32.totalorder %s19, 7
    %p212 = por %p210, %p211
    %p214 = scmp.ne.s32.totalorder %s199, %s213
    %p215 = scmp.eq.s32.totalorder %s19, 0
    %p216 = por %p214, %p215
    %s217 = ssub.s32 %s21, %s28
    %s218 = ssub.s32 %s20, %s32
    %s219 = sor.u32 %s217, %s218
    %p220 = scmp.eq.s32.totalorder %s219, 0
    %s222 = sadd.s32 %s221, 1
    %s223 = scalar_select %p220, %s221, %s222
    %p226 = pneg %p220
    %p227 = scmp.eq.s32.totalorder %s13, 7
    %p228 = por %p226, %p227
    %p229 = scmp.ne.s32.totalorder %s221, %s224
    %p230 = scmp.eq.s32.totalorder %s13, 0
    %p231 = por %p229, %p230
    %p232 = scmp.ne.s32.totalorder %s221, %s224
    %p233 = scmp.eq.s32.totalorder %s18, 7
    %p234 = por %p232, %p233
    %p235 = scmp.ne.s32.totalorder %s224, %s225
    %p236 = scmp.eq.s32.totalorder %s18, 0
    %p237 = por %p235, %p236
    %p238 = scmp.ne.s32.totalorder %s224, %s225
    %p239 = scmp.eq.s32.totalorder %s19, 7
    %p240 = por %p238, %p239
    %p242 = scmp.ne.s32.totalorder %s225, %s241
    %p243 = scmp.eq.s32.totalorder %s19, 0
    %p244 = por %p242, %p243
    %p245 = scmp.le.s32.totalorder 1, %s13
    %p246 = scmp.lt.s32.totalorder %s13, 9
    %p247 = pnand %p245, %p246
    %p248 = pneg %p247
    // Predicated region
    $region9: #{_lambda_.2} parent=5 // pred_check
      _
    $region10: #{_lambda_.2} parent=5 // pred_check_branch
      %250 = sbr.rel (%p247) target = $region12
    $region11: #{_lambda_.2} parent=5 // pred_region
      %s251 = ssub.s32 %s13, 1
      // Predicated region
      $region13: #{_lambda_.2} parent=11 // pred_check
        %p252 = pneg %p146
      $region14: #{_lambda_.2} parent=11 // pred_check_branch
        %254 = sbr.rel (%p252) target = $region16
      $region15: #{_lambda_.2} parent=11 // pred_region
        _
      $region16: #{_lambda_.2} parent=11 // pred_fallthru
        _
      // Predicated region
      $region17: #{_lambda_.2} parent=11 // pred_check
        %p255 = pneg %p167
      $region18: #{_lambda_.2} parent=11 // pred_check_branch
        %257 = sbr.rel (%p255) target = $region20
      $region19: #{_lambda_.2} parent=11 // pred_region
        _
      $region20: #{_lambda_.2} parent=11 // pred_fallthru
        _
      // Predicated region
      $region21: #{_lambda_.2} parent=11 // pred_check
        %p258 = pneg %p188
      $region22: #{_lambda_.2} parent=11 // pred_check_branch
        %260 = sbr.rel (%p258) target = $region24
      $region23: #{_lambda_.2} parent=11 // pred_region
        _
      $region24: #{_lambda_.2} parent=11 // pred_fallthru
        _
      // Predicated region
      $region25: #{_lambda_.2} parent=11 // pred_check
        %p261 = pneg %p209
      $region26: #{_lambda_.2} parent=11 // pred_check_branch
        %263 = sbr.rel (%p261) target = $region28
      $region27: #{_lambda_.2} parent=11 // pred_region
        _
      $region28: #{_lambda_.2} parent=11 // pred_fallthru
        _
    $region12: #{_lambda_.2} parent=5 // pred_fallthru
      _
    %p264 = scmp.lt.s32.totalorder %s13, 8
    // Predicated region
    $region29: #{_lambda_.2} parent=5 // pred_check
      %p265 = pneg %p264
    $region30: #{_lambda_.2} parent=5 // pred_check_branch
      %267 = sbr.rel (%p265) target = $region32
    $region31: #{_lambda_.2} parent=5 // pred_region
      // Predicated region
      $region33: #{_lambda_.2} parent=31 // pred_check
        %p268 = pneg %p55
      $region34: #{_lambda_.2} parent=31 // pred_check_branch
        %270 = sbr.rel (%p268) target = $region36
      $region35: #{_lambda_.2} parent=31 // pred_region
        %s271 = smul.u32 %s20, 4
        %s272 = ssub.s32 %s271, 1
        %p273 = scmp.gt.s32.totalorder %s272, 0
        %s274 = scalar_select %p273, %s272, 0
        %p275 = scmp.lt.s32.totalorder %s21, 1
        %s276 = scalar_select %p275, %s21, 1
        %p277 = scmp.lt.s32.totalorder %s274, 15
        %s278 = scalar_select %p277, %s274, 15
        %s279 = smul.addr %s276, 16
        %s280 = sadd.s32 %s278, %s279
        %s281 = smul.addr %s280, 8
        %s282 = scalar_lea.vmem %s0, %s281
        %s283 = smul.u32 %s20, 4
        %s284 = ssub.s32 %s283, 1
        %p285 = scmp.gt.s32.totalorder %s284, 0
        %s286 = scalar_select %p285, %s284, 0
      $region36: #{_lambda_.2} parent=31 // pred_fallthru
        _
      // Predicated region
      $region37: #{_lambda_.2} parent=31 // pred_check
        %p287 = pneg %p83
      $region38: #{_lambda_.2} parent=31 // pred_check_branch
        %289 = sbr.rel (%p287) target = $region40
      $region39: #{_lambda_.2} parent=31 // pred_region
        %s290 = smul.u32 4, %s20
        %p291 = scmp.lt.s32.totalorder %s21, 1
        %s292 = scalar_select %p291, %s21, 1
        %p293 = scmp.lt.s32.totalorder %s290, 15
        %s294 = scalar_select %p293, %s290, 15
        %s295 = smul.addr %s292, 16
        %s296 = sadd.s32 %s294, %s295
        %s297 = smul.addr %s296, 8
        %s298 = scalar_lea.vmem %s1, %s297
        %s299 = smul.u32 4, %s20
      $region40: #{_lambda_.2} parent=31 // pred_fallthru
        _
      // Predicated region
      $region41: #{_lambda_.2} parent=31 // pred_check
        %p300 = pneg %p119
      $region42: #{_lambda_.2} parent=31 // pred_check_branch
        %302 = sbr.rel (%p300) target = $region44
      $region43: #{_lambda_.2} parent=31 // pred_region
        %s303 = sadd.s32 %s20, 1
        %s304 = smul.u32 %s303, 4
        %p305 = scmp.lt.s32.totalorder %s304, 15
        %s306 = scalar_select %p305, %s304, 15
        %p307 = scmp.lt.s32.totalorder %s21, 1
        %s308 = scalar_select %p307, %s21, 1
        %p309 = scmp.lt.s32.totalorder %s306, 15
        %s310 = scalar_select %p309, %s306, 15
        %s311 = smul.addr %s308, 16
        %s312 = sadd.s32 %s310, %s311
        %s313 = smul.addr %s312, 8
        %s314 = scalar_lea.vmem %s2, %s313
        %s315 = sadd.s32 %s20, 1
        %s316 = smul.u32 %s315, 4
        %p317 = scmp.lt.s32.totalorder %s316, 15
        %s318 = scalar_select %p317, %s316, 15
      $region44: #{_lambda_.2} parent=31 // pred_fallthru
        _
    $region32: #{_lambda_.2} parent=5 // pred_fallthru
      _
    %p319 = scmp.le.s32.totalorder 1, %s13
    %p320 = scmp.lt.s32.totalorder %s13, 9
    %p321 = pnand %p319, %p320
    %p322 = pneg %p321
    // Predicated region
    $region45: #{_lambda_.2} parent=5 // pred_check
      _
    $region46: #{_lambda_.2} parent=5 // pred_check_branch
      %324 = sbr.rel (%p321) target = $region48
    $region47: #{_lambda_.2} parent=5 // pred_region
      %s325 = ssub.s32 %s13, 1
      %s326 = smul.u32 %s22, 4
      %s327 = ssub.s32 %s326, 1
      %p328 = scmp.gt.s32.totalorder %s327, 0
      %s329 = scalar_select %p328, %s327, 0
      %p330 = scmp.lt.s32.totalorder %s23, 1
      %s331 = scalar_select %p330, %s23, 1
      %p332 = scmp.lt.s32.totalorder %s329, 15
      %s333 = scalar_select %p332, %s329, 15
      %s334 = smul.addr %s331, 16
      %s335 = sadd.s32 %s333, %s334
      %s336 = smul.addr %s335, 8
      %s337 = scalar_lea.vmem %s0, %s336
      %p338 = pneg %p61
      %p339 = pneg %p58
      %s340 = smul.u32 4, %s22
      %p341 = scmp.lt.s32.totalorder %s23, 1
      %s342 = scalar_select %p341, %s23, 1
      %p343 = scmp.lt.s32.totalorder %s340, 15
      %s344 = scalar_select %p343, %s340, 15
      %s345 = smul.addr %s342, 16
      %s346 = sadd.s32 %s344, %s345
      %s347 = smul.addr %s346, 8
      %s348 = scalar_lea.vmem %s1, %s347
      %p349 = pneg %p89
      %p350 = pneg %p86
      %s351 = sadd.s32 %s22, 1
      %s352 = smul.u32 %s351, 4
      %p353 = scmp.lt.s32.totalorder %s352, 15
      %s354 = scalar_select %p353, %s352, 15
      %p355 = scmp.lt.s32.totalorder %s23, 1
      %s356 = scalar_select %p355, %s23, 1
      %p357 = scmp.lt.s32.totalorder %s354, 15
      %s358 = scalar_select %p357, %s354, 15
      %s359 = smul.addr %s356, 16
      %s360 = sadd.s32 %s358, %s359
      %s361 = smul.addr %s360, 8
      %s362 = scalar_lea.vmem %s2, %s361
      %p363 = pneg %p125
      %p364 = pneg %p122
      %p365 = pneg %p146
      %p366 = pneg %p143
      %p367 = pneg %p167
      %p368 = pneg %p164
      %p369 = pneg %p188
      %p370 = pneg %p185
      %p371 = pneg %p209
      %p372 = pneg %p206
      %p373 = pneg %p237
      %p374 = pneg %p234
      %s375 = smul.u32 4, %s22
      %p376 = scmp.lt.s32.totalorder %s23, 1
      %s377 = scalar_select %p376, %s23, 1
      %p378 = scmp.lt.s32.totalorder %s375, 15
      %s379 = scalar_select %p378, %s375, 15
      %s380 = smul.addr %s377, 16
      %s381 = sadd.s32 %s379, %s380
      %s382 = smul.addr %s381, 8
      %s383 = scalar_lea.vmem %s7, %s382
      %s384 = smul.u32 %s22, 4
      %s385 = ssub.s32 %s384, 1
      %p386 = scmp.gt.s32.totalorder %s385, 0
      %s387 = scalar_select %p386, %s385, 0
      %p388 = scmp.lt.s32.totalorder %s23, 1
      %s389 = scalar_select %p388, %s23, 1
      %p390 = scmp.lt.s32.totalorder %s387, 15
      %s391 = scalar_select %p390, %s387, 15
      %s392 = smul.addr %s389, 16
      %s393 = sadd.s32 %s391, %s392
      %s394 = smul.addr %s393, 8
      %s395 = scalar_lea.vmem %s0, %s394
      %s396 = smul.u32 %s22, 4
      %s397 = ssub.s32 %s396, 1
      %p398 = scmp.gt.s32.totalorder %s397, 0
      %s399 = scalar_select %p398, %s397, 0
      %s400 = smul.u32 4, %s22
      %p401 = scmp.lt.s32.totalorder %s23, 1
      %s402 = scalar_select %p401, %s23, 1
      %p403 = scmp.lt.s32.totalorder %s400, 15
      %s404 = scalar_select %p403, %s400, 15
      %s405 = smul.addr %s402, 16
      %s406 = sadd.s32 %s404, %s405
      %s407 = smul.addr %s406, 8
      %s408 = scalar_lea.vmem %s1, %s407
      %s409 = smul.u32 4, %s22
      %s410 = sadd.s32 %s22, 1
      %s411 = smul.u32 %s410, 4
      %p412 = scmp.lt.s32.totalorder %s411, 15
      %s413 = scalar_select %p412, %s411, 15
      %p414 = scmp.lt.s32.totalorder %s23, 1
      %s415 = scalar_select %p414, %s23, 1
      %p416 = scmp.lt.s32.totalorder %s413, 15
      %s417 = scalar_select %p416, %s413, 15
      %s418 = smul.addr %s415, 16
      %s419 = sadd.s32 %s417, %s418
      %s420 = smul.addr %s419, 8
      %s421 = scalar_lea.vmem %s2, %s420
      %s422 = sadd.s32 %s22, 1
      %s423 = smul.u32 %s422, 4
      %p424 = scmp.lt.s32.totalorder %s423, 15
      %s425 = scalar_select %p424, %s423, 15
      %s426 = smul.u32 4, %s22
      %p427 = scmp.lt.s32.totalorder %s23, 1
      %s428 = scalar_select %p427, %s23, 1
      %p429 = scmp.lt.s32.totalorder %s426, 15
      %s430 = scalar_select %p429, %s426, 15
      %s431 = smul.addr %s428, 16
      %s432 = sadd.s32 %s430, %s431
      %s433 = smul.addr %s432, 8
      %s434 = scalar_lea.vmem %s7, %s433
      %s435 = smul.u32 4, %s22
      %v436 = vld [vmem:[%s395] sm:$0xff]
      %v437 = vld [vmem:[%s408] sm:$0xff]
      %v438 = vld [vmem:[%s408 + $0x8] sm:$0xff]
      %v439 = vld [vmem:[%s408 + $0x10] sm:$0xff]
      %v440 = vld [vmem:[%s408 + $0x18] sm:$0xff]
      %v441 = vld [vmem:[%s421] sm:$0xff]
      %p442 = scmp.eq.s32.totalorder %s22, 0
      %s443 = scalar_select %p442, 0.0, 1.0
      %v444 = vstv %s443
      %v445 = vmul.f32 %v436, %v444
      %p446 = scmp.eq.s32.totalorder %s22, 3
      %s447 = scalar_select %p446, 0.0, 1.0
      %v448 = vstv %s447
      %v449 = vmul.f32 %v441, %v448
      %vm454 = vcmask 1046528
      %v455 = vrot.slane %v437, 1
      %v456 = vrot.slane %v438, 1
      %v457 = vsel %vm454, %v455, %v456
      %v458 = vrot.slane %v439, 1
      %v459 = vsel %vm454, %v456, %v458
      %v460 = vrot.slane %v440, 1
      %v461 = vsel %vm454, %v458, %v460
      %462 = vrot.lane.b32.xlu0 %v455, 16
      %v463 = vpop.permute.xlu0 %462
      %464 = vrot.lane.b32.xlu0 %v457, 16
      %v465 = vpop.permute.xlu0 %464
      %466 = vrot.lane.b32.xlu0 %v459, 16
      %v467 = vpop.permute.xlu0 %466
      %468 = vrot.lane.b32.xlu0 %v461, 16
      %v469 = vpop.permute.xlu0 %468
      %470 = vrot.lane.b32.xlu0 %v460, 16
      %v471 = vpop.permute.xlu0 %470
      %vm478 = vcmask 1045504
      %v479 = vrot.slane %v437, 2
      %v480 = vrot.slane %v438, 2
      %v481 = vsel %vm478, %v479, %v480
      %v482 = vrot.slane %v439, 2
      %v483 = vsel %vm478, %v480, %v482
      %v484 = vrot.slane %v440, 2
      %v485 = vsel %vm478, %v482, %v484
      %v486 = vrot.slane %v449, 2
      %v487 = vsel %vm478, %v484, %v486
      %488 = vrot.lane.b32.xlu0 %v479, 32
      %v489 = vpop.permute.xlu0 %488
      %490 = vrot.lane.b32.xlu0 %v481, 32
      %v491 = vpop.permute.xlu0 %490
      %492 = vrot.lane.b32.xlu0 %v483, 32
      %v493 = vpop.permute.xlu0 %492
      %494 = vrot.lane.b32.xlu0 %v485, 32
      %v495 = vpop.permute.xlu0 %494
      %496 = vrot.lane.b32.xlu0 %v487, 32
      %v497 = vpop.permute.xlu0 %496
      %vm503 = vcmask 130048
      %v504 = vsel %vm503, %v445, %v463
      %v505 = vsel %vm503, %v437, %v465
      %v506 = vsel %vm503, %v438, %v467
      %v507 = vsel %vm503, %v439, %v469
      %v508 = vsel %vm503, %v440, %v471
      %vm509 = vcmask 261120
      %v510 = vsel %vm509, %v504, %v489
      %v511 = vsel %vm509, %v505, %v491
      %v512 = vsel %vm509, %v506, %v493
      %v513 = vsel %vm509, %v507, %v495
      %v514 = vsel %vm509, %v508, %v497
      %v515 = vld [vmem:[%s3] sm:$0xff]
      %v516 = vld [vmem:[%s3 + $0x8] sm:$0xff]
      %v517 = vld [vmem:[%s3 + $0x10] sm:$0xff]
      %v518 = vld [vmem:[%s3 + $0x18] sm:$0xff]
      %v519 = vld [vmem:[%s3 + $0x20] sm:$0xff]
      %v520 = vld [vmem:[%s3 + $0x28] sm:$0xff]
      %v521 = vld [vmem:[%s4] sm:$0x1]
      %v523 = vlaneseq
      %v524 = vshrl.u32 %v523, 7
      %v525 = vsub.s32 0, %v524
      %v526 = vrot.slane %v521, %v525
      %vm533 = vcmask 1040384
      %v534 = vrot.slane %v510, 7
      %v535 = vrot.slane %v511, 7
      %v536 = vsel %vm533, %v534, %v535
      %v537 = vrot.slane %v512, 7
      %v538 = vsel %vm533, %v535, %v537
      %v539 = vrot.slane %v513, 7
      %v540 = vsel %vm533, %v537, %v539
      %v541 = vrot.slane %v514, 7
      %v542 = vsel %vm533, %v539, %v541
      %vm543 = vcmask 392192
      %v544 = vsel %vm543, %v536, 0
      %v546 = vsel %vm543, %v538, 0
      %v548 = vsel %vm543, %v540, 0
      %v550 = vsel %vm543, %v542, 0
      %552 = vmatprep.subr.mxu0 0.0
      %553 = vmatpush1.msra.mxu0 %v515
      %554 = vmatprep.subr.mxu0 0.0
      %555 = vmatpush1.msra.mxu0 %v516
      %556 = vmatprep.subr.mxu0 0.0
      %557 = vmatpush1.msra.mxu0 %v517
      %558 = vmatprep.subr.mxu0 0.0
      %559 = vmatpush1.msra.mxu0 %v518
      %560 = vmatprep.subr.mxu0 0.0
      %561 = vmatpush1.msra.mxu0 %v519
      %562 = vmatprep.subr.mxu0 0.0
      %563 = vmatpush1.msra.mxu0 %v520
      %564 = vmatprep.subr.mxu0 0.0
      %565 = vmatpush1.msra.mxu0 0.0
      %566 = vmatprep.subr.mxu0 0.0
      %567 = vmatpush1.msra.mxu0 0.0
      %568 = vmatprep.subr.mxu0 0.0
      %569 = vmatpush1.msra.mxu0 0.0
      %570 = vmatprep.subr.mxu0 0.0
      %571 = vmatpush1.msra.mxu0 0.0
      %572 = vmatprep.subr.mxu0 0.0
      %573 = vmatpush1.msra.mxu0 0.0
      %574 = vmatprep.subr.mxu0 0.0
      %575 = vmatpush1.msra.mxu0 0.0
      %576 = vmatprep.subr.mxu0 0.0
      %577 = vmatpush1.msra.mxu0 0.0
      %578 = vmatprep.subr.mxu0 0.0
      %579 = vmatpush1.msra.mxu0 0.0
      %580 = vmatprep.subr.mxu0 0.0
      %581 = vmatpush1.msra.mxu0 0.0
      %582 = vmatprep.subr.mxu0 0.0
      %583 = vmatpush1.msra.mxu0 0.0
      %584 = vmatprep.subr.mxu0 0.0
      %585 = vmatpush1.msra.mxu0 0.0
      %586 = vmatprep.subr.mxu0 0.0
      %587 = vmatpush1.msra.mxu0 0.0
      %588 = vmatprep.subr.mxu0 0.0
      %589 = vmatpush1.msra.mxu0 0.0
      %590 = vmatprep.subr.mxu0 0.0
      %591 = vmatpush1.msra.mxu0 0.0
      %592 = vmatprep.subr.mxu0 0.0
      %593 = vmatpush1.msra.mxu0 0.0
      %594 = vmatprep.subr.mxu0 0.0
      %595 = vmatpush1.msra.mxu0 0.0
      %596 = vmatprep.subr.mxu0 0.0
      %597 = vmatpush1.msra.mxu0 0.0
      %598 = vmatprep.subr.mxu0 0.0
      %599 = vmatpush1.msra.mxu0 0.0
      %600 = vmatprep.subr.mxu0 0.0
      %601 = vmatpush1.msra.mxu0 0.0
      %602 = vmatprep.subr.mxu0 0.0
      %603 = vmatpush1.msra.mxu0 0.0
      %604 = vmatprep.subr.mxu0 0.0
      %605 = vmatpush1.msra.mxu0 0.0
      %606 = vmatprep.subr.mxu0 0.0
      %607 = vmatpush1.msra.mxu0 0.0
      %608 = vmatprep.subr.mxu0 0.0
      %609 = vmatpush1.msra.mxu0 0.0
      %610 = vmatprep.subr.mxu0 0.0
      %611 = vmatpush1.msra.mxu0 0.0
      %612 = vmatprep.subr.mxu0 0.0
      %613 = vmatpush1.msra.mxu0 0.0
      %614 = vmatprep.subr.mxu0 0.0
      %615 = vmatpush1.msra.mxu0 0.0
      %616 = vmatprep.mubr.f32.mxu0 0.0
      %617 = vmatmul.mubr.f32.gmra.mrb[0].mxu0 %v544
      %v618 = vpop.f32.mrb[0].mxu0
      %v619 = vadd.f32 %v526, %v618
      %v620 = vpop.f32.mrb[0].mxu0
      %621 = vmatprep.mubr.f32.mxu0 0.0
      %622 = vmatmul.mubr.f32.gmra.mrb[0].mxu0 %v546
      %v623 = vpop.f32.mrb[0].mxu0
      %v624 = vadd.f32 %v526, %v623
      %v625 = vpop.f32.mrb[0].mxu0
      %626 = vmatprep.mubr.f32.mxu0 0.0
      %627 = vmatmul.mubr.f32.gmra.mrb[0].mxu0 %v548
      %v628 = vpop.f32.mrb[0].mxu0
      %v629 = vadd.f32 %v526, %v628
      %v630 = vpop.f32.mrb[0].mxu0
      %631 = vmatprep.mubr.f32.mxu0 0.0
      %632 = vmatmul.mubr.f32.gmra.mrb[0].mxu0 %v550
      %v633 = vpop.f32.mrb[0].mxu0
      %v634 = vadd.f32 %v526, %v633
      %v635 = vpop.f32.mrb[0].mxu0
      %636 = vdwg.mxu0
      %vm637 = vcmp.ge.f32.partialorder %v619, 0.0
      %vm638 = vcmp.ge.f32.partialorder %v624, 0.0
      %vm639 = vcmp.ge.f32.partialorder %v629, 0.0
      %vm640 = vcmp.ge.f32.partialorder %v634, 0.0
      %v641 = vmul.f32 %v619, 0.01
      %v642 = vmul.f32 %v624, 0.01
      %v643 = vmul.f32 %v629, 0.01
      %v644 = vmul.f32 %v634, 0.01
      %v645 = vsel %vm637, %v619, %v641
      %v646 = vsel %vm638, %v624, %v642
      %v647 = vsel %vm639, %v629, %v643
      %v648 = vsel %vm640, %v634, %v644
      %v649 = vld [vmem:[%s5] sm:$0xff]
      %v650 = vld [vmem:[%s5 + $0x8] sm:$0xff]
      %v651 = vld [vmem:[%s6] sm:$0x1]
      %v653 = vlaneseq
      %v654 = vshrl.u32 %v653, 7
      %v655 = vsub.s32 0, %v654
      %v656 = vrot.slane %v651, %v655
      %v659 = vsel %vm503, %v645, 0
      %v662 = vsel %vm503, %v646, 0
      %v665 = vsel %vm503, %v647, 0
      %v668 = vsel %vm503, %v648, 0
      %670 = vmatprep.subr.mxu0 0.0
      %671 = vmatpush1.msra.mxu0 %v649
      %672 = vmatprep.subr.mxu0 0.0
      %673 = vmatpush1.msra.mxu0 %v650
      %674 = vmatprep.subr.mxu0 0.0
      %675 = vmatpush1.msra.mxu0 0.0
      %676 = vmatprep.subr.mxu0 0.0
      %677 = vmatpush1.msra.mxu0 0.0
      %678 = vmatprep.subr.mxu0 0.0
      %679 = vmatpush1.msra.mxu0 0.0
      %680 = vmatprep.subr.mxu0 0.0
      %681 = vmatpush1.msra.mxu0 0.0
      %682 = vmatprep.subr.mxu0 0.0
      %683 = vmatpush1.msra.mxu0 0.0
      %684 = vmatprep.subr.mxu0 0.0
      %685 = vmatpush1.msra.mxu0 0.0
      %686 = vmatprep.subr.mxu0 0.0
      %687 = vmatpush1.msra.mxu0 0.0
      %688 = vmatprep.subr.mxu0 0.0
      %689 = vmatpush1.msra.mxu0 0.0
      %690 = vmatprep.subr.mxu0 0.0
      %691 = vmatpush1.msra.mxu0 0.0
      %692 = vmatprep.subr.mxu0 0.0
      %693 = vmatpush1.msra.mxu0 0.0
      %694 = vmatprep.subr.mxu0 0.0
      %695 = vmatpush1.msra.mxu0 0.0
      %696 = vmatprep.subr.mxu0 0.0
      %697 = vmatpush1.msra.mxu0 0.0
      %698 = vmatprep.subr.mxu0 0.0
      %699 = vmatpush1.msra.mxu0 0.0
      %700 = vmatprep.subr.mxu0 0.0
      %701 = vmatpush1.msra.mxu0 0.0
      %702 = vmatprep.subr.mxu0 0.0
      %703 = vmatpush1.msra.mxu0 0.0
      %704 = vmatprep.subr.mxu0 0.0
      %705 = vmatpush1.msra.mxu0 0.0
      %706 = vmatprep.subr.mxu0 0.0
      %707 = vmatpush1.msra.mxu0 0.0
      %708 = vmatprep.subr.mxu0 0.0
      %709 = vmatpush1.msra.mxu0 0.0
      %710 = vmatprep.subr.mxu0 0.0
      %711 = vmatpush1.msra.mxu0 0.0
      %712 = vmatprep.subr.mxu0 0.0
      %713 = vmatpush1.msra.mxu0 0.0
      %714 = vmatprep.subr.mxu0 0.0
      %715 = vmatpush1.msra.mxu0 0.0
      %716 = vmatprep.subr.mxu0 0.0
      %717 = vmatpush1.msra.mxu0 0.0
      %718 = vmatprep.subr.mxu0 0.0
      %719 = vmatpush1.msra.mxu0 0.0
      %720 = vmatprep.subr.mxu0 0.0
      %721 = vmatpush1.msra.mxu0 0.0
      %722 = vmatprep.subr.mxu0 0.0
      %723 = vmatpush1.msra.mxu0 0.0
      %724 = vmatprep.subr.mxu0 0.0
      %725 = vmatpush1.msra.mxu0 0.0
      %726 = vmatprep.subr.mxu0 0.0
      %727 = vmatpush1.msra.mxu0 0.0
      %728 = vmatprep.subr.mxu0 0.0
      %729 = vmatpush1.msra.mxu0 0.0
      %730 = vmatprep.subr.mxu0 0.0
      %731 = vmatpush1.msra.mxu0 0.0
      %732 = vmatprep.subr.mxu0 0.0
      %733 = vmatpush1.msra.mxu0 0.0
      %734 = vmatprep.mubr.f32.mxu0 0.0
      %735 = vmatmul.mubr.f32.gmra.mrb[0].mxu0 %v659
      %v736 = vpop.f32.mrb[0].mxu0
      %v737 = vadd.f32 %v656, %v736
      %v738 = vpop.f32.mrb[0].mxu0
      %739 = vmatprep.mubr.f32.mxu0 0.0
      %740 = vmatmul.mubr.f32.gmra.mrb[0].mxu0 %v662
      %v741 = vpop.f32.mrb[0].mxu0
      %v742 = vadd.f32 %v656, %v741
      %v743 = vpop.f32.mrb[0].mxu0
      %744 = vmatprep.mubr.f32.mxu0 0.0
      %745 = vmatmul.mubr.f32.gmra.mrb[0].mxu0 %v665
      %v746 = vpop.f32.mrb[0].mxu0
      %v747 = vadd.f32 %v656, %v746
      %v748 = vpop.f32.mrb[0].mxu0
      %749 = vmatprep.mubr.f32.mxu0 0.0
      %750 = vmatmul.mubr.f32.gmra.mrb[0].mxu0 %v668
      %v751 = vpop.f32.mrb[0].mxu0
      %v752 = vadd.f32 %v656, %v751
      %v753 = vpop.f32.mrb[0].mxu0
      %754 = vdwg.mxu0
      %vm755 = vcmp.ge.f32.partialorder %v737, 0.0
      %vm756 = vcmp.ge.f32.partialorder %v742, 0.0
      %vm757 = vcmp.ge.f32.partialorder %v747, 0.0
      %vm758 = vcmp.ge.f32.partialorder %v752, 0.0
      %v759 = vmul.f32 %v737, 0.01
      %v760 = vmul.f32 %v742, 0.01
      %v761 = vmul.f32 %v747, 0.01
      %v762 = vmul.f32 %v752, 0.01
      %v763 = vsel %vm755, %v737, %v759
      %v764 = vsel %vm756, %v742, %v760
      %v765 = vsel %vm757, %v747, %v761
      %v766 = vsel %vm758, %v752, %v762
      %v767 = vadd.f32 %v437, %v763
      %v768 = vadd.f32 %v438, %v764
      %v769 = vadd.f32 %v439, %v765
      %v770 = vadd.f32 %v440, %v766
      %s771 = smul.u32 %s22, 32
      %v772 = vlaneseq
      %v773 = vshrl.u32 %v772, 7
      %v774 = vadd.s32 %v773, 8
      %v775 = vadd.s32 %v773, 16
      %v776 = vadd.s32 %v773, 24
      %v777 = vstv %s771
      %v778 = vadd.s32 %v777, %v773
      %v779 = vadd.s32 %v777, %v774
      %v780 = vadd.s32 %v777, %v775
      %v781 = vadd.s32 %v777, %v776
      %vm782 = vcmp.lt.s32.totalorder %v778, 100
      %vm783 = vcmp.lt.s32.totalorder %v779, 100
      %vm784 = vcmp.lt.s32.totalorder %v780, 100
      %vm785 = vcmp.lt.s32.totalorder %v781, 100
      %v786 = vsel %vm782, %v767, 0.0
      %v787 = vsel %vm783, %v768, 0.0
      %v788 = vsel %vm784, %v769, 0.0
      %v789 = vsel %vm785, %v770, 0.0
      %790 = vst.msk [vmem:[%s434] sm:$0xff] %vm503, %v786
      %791 = vst.msk [vmem:[%s434 + $0x8] sm:$0xff] %vm503, %v787
      %792 = vst.msk [vmem:[%s434 + $0x10] sm:$0xff] %vm503, %v788
      %793 = vst.msk [vmem:[%s434 + $0x18] sm:$0xff] %vm503, %v789
      %s794 = smul.u32 4, %s22
      %p795 = scmp.lt.s32.totalorder %s23, 1
      %s796 = scalar_select %p795, %s23, 1
      %p797 = scmp.lt.s32.totalorder %s794, 15
      %s798 = scalar_select %p797, %s794, 15
      %s799 = smul.addr %s796, 16
      %s800 = sadd.s32 %s798, %s799
      %s801 = smul.addr %s800, 8
      %s802 = scalar_lea.vmem %s7, %s801
      // Predicated region
      $region49: #{_lambda_.2} parent=47 // pred_check
        %p803 = pneg %p234
      $region50: #{_lambda_.2} parent=47 // pred_check_branch
        %805 = sbr.rel (%p803) target = $region52
      $region51: #{_lambda_.2} parent=47 // pred_region
        %s806 = smul.u32 4, %s22
      $region52: #{_lambda_.2} parent=47 // pred_fallthru
        _
    $region48: #{_lambda_.2} parent=5 // pred_fallthru
      _
    %p807 = scmp.le.s32.totalorder 2, %s13
    // Predicated region
    $region53: #{_lambda_.2} parent=5 // pred_check
      %p808 = pneg %p807
    $region54: #{_lambda_.2} parent=5 // pred_check_branch
      %810 = sbr.rel (%p808) target = $region56
    $region55: #{_lambda_.2} parent=5 // pred_region
      %s811 = ssub.s32 %s13, 2
      // Predicated region
      $region57: #{_lambda_.2} parent=55 // pred_check
        %p812 = pneg %p240
      $region58: #{_lambda_.2} parent=55 // pred_check_branch
        %814 = sbr.rel (%p812) target = $region60
      $region59: #{_lambda_.2} parent=55 // pred_region
        %s815 = smul.u32 4, %s24
        %p816 = scmp.lt.s32.totalorder %s25, 1
        %s817 = scalar_select %p816, %s25, 1
        %p818 = scmp.lt.s32.totalorder %s815, 15
        %s819 = scalar_select %p818, %s815, 15
        %s820 = smul.addr %s817, 16
        %s821 = sadd.s32 %s819, %s820
        %s822 = smul.addr %s821, 8
        %s823 = scalar_lea.vmem %s7, %s822
      $region60: #{_lambda_.2} parent=55 // pred_fallthru
        _
    $region56: #{_lambda_.2} parent=5 // pred_fallthru
      _
  $region6: #{_lambda_.2} parent=0 // loop_footer
    %s17 = sadd.s32 1, %s13
  $region7: #{_lambda_.2} parent=0 // loop_footer_branch
    %12 = sbr.rel target = $region3
  $region8: #{_lambda_.2} parent=0 // loop_exit
    _

// kernel: _lambda_.3
$region0: #{_lambda_.3}
  #allocation0 [shape = 'u32[]', space=smem, size = 0x4, offset = 0x4, fixed_abs, tag = 'smem constant byte address 0x4 - core index']
  #allocation1 [shape = 'u32[144,128]{1,0:T(1,128)}', space=vmem, size = 0x12000, scoped, tag = 'internal scratch']
  %s0 = inlined_call_operand.vmem [shape: f32[2,128,16], index: 0, kind: input, shape index: {}, may-alias: {0,1,2}]
  %s1 = inlined_call_operand.vmem [shape: f32[2,128,16], index: 1, kind: input, shape index: {}, may-alias: {0,1,2}]
  %s2 = inlined_call_operand.vmem [shape: f32[2,128,16], index: 2, kind: input, shape index: {}, may-alias: {0,1,2}]
  %s3 = inlined_call_operand.vmem [shape: f32[48,16], index: 3, kind: input, shape index: {}]
  %s4 = inlined_call_operand.vmem [shape: f32[1,16], index: 4, kind: input, shape index: {}]
  %s5 = inlined_call_operand.vmem [shape: f32[16,16], index: 5, kind: input, shape index: {}]
  %s6 = inlined_call_operand.vmem [shape: f32[1,16], index: 6, kind: input, shape index: {}]
  %s7 = inlined_call_operand.vmem [shape: f32[2,128,16], index: 7, kind: output, shape index: {}]
  %s8 = sld [smem:[#allocation0]]
  $region61: #{_lambda_.3} parent=0
    _
  %s10 = ssub.s32 1, %s8
  %s11 = scalar_select 0, %s10, %s8
  loop: start=0, step=1, limit=10
  $region2: #{_lambda_.3} parent=0 // loop_pre_header
    _
  $region3: #{_lambda_.3} parent=0 // loop_header
    %s13 = sphi 0, %s17
    %p14 = scmp.ge.s32.totalorder %s13, 10
    %s20 = sphi 0, %s32
    %s21 = sphi 0, %s28
    %s22 = sphi 0, %s20
    %s23 = sphi 0, %s21
    %s24 = sphi 0, %s22
    %s25 = sphi 0, %s23
    %s45 = sphi 0, %s47
    %s48 = sphi 0, %s45
    %s49 = sphi 0, %s48
    %s65 = sphi 0, %s49
    %s73 = sphi 0, %s75
    %s76 = sphi 0, %s73
    %s77 = sphi 0, %s76
    %s93 = sphi 0, %s77
    %s109 = sphi 0, %s111
    %s112 = sphi 0, %s109
    %s113 = sphi 0, %s112
    %s129 = sphi 0, %s113
    %s133 = sphi 0, %s133
    %s135 = sphi 0, %s133
    %s136 = sphi 0, %s135
    %s150 = sphi 0, %s136
    %s154 = sphi 0, %s154
    %s156 = sphi 0, %s154
    %s157 = sphi 0, %s156
    %s171 = sphi 0, %s157
    %s175 = sphi 0, %s175
    %s177 = sphi 0, %s175
    %s178 = sphi 0, %s177
    %s192 = sphi 0, %s178
    %s196 = sphi 0, %s196
    %s198 = sphi 0, %s196
    %s199 = sphi 0, %s198
    %s213 = sphi 0, %s199
    %s221 = sphi 0, %s223
    %s224 = sphi 0, %s221
    %s225 = sphi 0, %s224
    %s241 = sphi 0, %s225
  $region4: #{_lambda_.3} parent=0 // loop_header_branch
    %16 = sbr.rel (%p14) target = $region8
  $region5: #{_lambda_.3} parent=0 // loop_body
    %s18 = ssub.s32 %s13, 1
    %s19 = ssub.s32 %s13, 2
    %s26 = sadd.s32 1, %s21
    %p27 = scmp.ge.s32.totalorder %s26, 2
    %s28 = scalar_select %p27, 0, %s26
    %s29 = sadd.s32 1, %s20
    %s30 = scalar_select %p27, %s29, %s20
    %p31 = scmp.ge.s32.totalorder %s30, 4
    %s32 = scalar_select %p31, 0, %s30
    %s33 = smul.u32 %s20, 4
    %s34 = ssub.s32 %s33, 1
    %p35 = scmp.gt.s32.totalorder %s34, 0
    %s36 = scalar_select %p35, %s34, 0
    %s37 = smul.u32 %s32, 4
    %s38 = ssub.s32 %s37, 1
    %p39 = scmp.gt.s32.totalorder %s38, 0
    %s40 = scalar_select %p39, %s38, 0
    %s41 = ssub.s32 %s21, %s28
    %s42 = ssub.s32 %s36, %s40
    %s43 = sor.u32 %s41, %s42
    %p44 = scmp.eq.s32.totalorder %s43, 0
    %s46 = sadd.s32 %s45, 1
    %s47 = scalar_select %p44, %s45, %s46
    %p50 = pneg %p44
    %p51 = scmp.eq.s32.totalorder %s13, 7
    %p52 = por %p50, %p51
    %p53 = scmp.ne.s32.totalorder %s45, %s48
    %p54 = scmp.eq.s32.totalorder %s13, 0
    %p55 = por %p53, %p54
    %p56 = scmp.ne.s32.totalorder %s45, %s48
    %p57 = scmp.eq.s32.totalorder %s18, 7
    %p58 = por %p56, %p57
    %p59 = scmp.ne.s32.totalorder %s48, %s49
    %p60 = scmp.eq.s32.totalorder %s18, 0
    %p61 = por %p59, %p60
    %p62 = scmp.ne.s32.totalorder %s48, %s49
    %p63 = scmp.eq.s32.totalorder %s19, 7
    %p64 = por %p62, %p63
    %p66 = scmp.ne.s32.totalorder %s49, %s65
    %p67 = scmp.eq.s32.totalorder %s19, 0
    %p68 = por %p66, %p67
    %s69 = ssub.s32 %s21, %s28
    %s70 = ssub.s32 %s20, %s32
    %s71 = sor.u32 %s69, %s70
    %p72 = scmp.eq.s32.totalorder %s71, 0
    %s74 = sadd.s32 %s73, 1
    %s75 = scalar_select %p72, %s73, %s74
    %p78 = pneg %p72
    %p79 = scmp.eq.s32.totalorder %s13, 7
    %p80 = por %p78, %p79
    %p81 = scmp.ne.s32.totalorder %s73, %s76
    %p82 = scmp.eq.s32.totalorder %s13, 0
    %p83 = por %p81, %p82
    %p84 = scmp.ne.s32.totalorder %s73, %s76
    %p85 = scmp.eq.s32.totalorder %s18, 7
    %p86 = por %p84, %p85
    %p87 = scmp.ne.s32.totalorder %s76, %s77
    %p88 = scmp.eq.s32.totalorder %s18, 0
    %p89 = por %p87, %p88
    %p90 = scmp.ne.s32.totalorder %s76, %s77
    %p91 = scmp.eq.s32.totalorder %s19, 7
    %p92 = por %p90, %p91
    %p94 = scmp.ne.s32.totalorder %s77, %s93
    %p95 = scmp.eq.s32.totalorder %s19, 0
    %p96 = por %p94, %p95
    %s97 = sadd.s32 %s20, 1
    %s98 = smul.u32 %s97, 4
    %p99 = scmp.lt.s32.totalorder %s98, 15
    %s100 = scalar_select %p99, %s98, 15
    %s101 = sadd.s32 %s32, 1
    %s102 = smul.u32 %s101, 4
    %p103 = scmp.lt.s32.totalorder %s102, 15
    %s104 = scalar_select %p103, %s102, 15
    %s105 = ssub.s32 %s21, %s28
    %s106 = ssub.s32 %s100, %s104
    %s107 = sor.u32 %s105, %s106
    %p108 = scmp.eq.s32.totalorder %s107, 0
    %s110 = sadd.s32 %s109, 1
    %s111 = scalar_select %p108, %s109, %s110
    %p114 = pneg %p108
    %p115 = scmp.eq.s32.totalorder %s13, 7
    %p116 = por %p114, %p115
    %p117 = scmp.ne.s32.totalorder %s109, %s112
    %p118 = scmp.eq.s32.totalorder %s13, 0
    %p119 = por %p117, %p118
    %p120 = scmp.ne.s32.totalorder %s109, %s112
    %p121 = scmp.eq.s32.totalorder %s18, 7
    %p122 = por %p120, %p121
    %p123 = scmp.ne.s32.totalorder %s112, %s113
    %p124 = scmp.eq.s32.totalorder %s18, 0
    %p125 = por %p123, %p124
    %p126 = scmp.ne.s32.totalorder %s112, %s113
    %p127 = scmp.eq.s32.totalorder %s19, 7
    %p128 = por %p126, %p127
    %p130 = scmp.ne.s32.totalorder %s113, %s129
    %p131 = scmp.eq.s32.totalorder %s19, 0
    %p132 = por %p130, %p131
    %s134 = sadd.s32 %s133, 1
    %p137 = scmp.eq.s32.totalorder %s13, 7
    %p138 = scmp.ne.s32.totalorder %s133, %s135
    %p139 = scmp.eq.s32.totalorder %s13, 0
    %p140 = por %p138, %p139
    %p141 = scmp.ne.s32.totalorder %s133, %s135
    %p142 = scmp.eq.s32.totalorder %s18, 7
    %p143 = por %p141, %p142
    %p144 = scmp.ne.s32.totalorder %s135, %s136
    %p145 = scmp.eq.s32.totalorder %s18, 0
    %p146 = por %p144, %p145
    %p147 = scmp.ne.s32.totalorder %s135, %s136
    %p148 = scmp.eq.s32.totalorder %s19, 7
    %p149 = por %p147, %p148
    %p151 = scmp.ne.s32.totalorder %s136, %s150
    %p152 = scmp.eq.s32.totalorder %s19, 0
    %p153 = por %p151, %p152
    %s155 = sadd.s32 %s154, 1
    %p158 = scmp.eq.s32.totalorder %s13, 7
    %p159 = scmp.ne.s32.totalorder %s154, %s156
    %p160 = scmp.eq.s32.totalorder %s13, 0
    %p161 = por %p159, %p160
    %p162 = scmp.ne.s32.totalorder %s154, %s156
    %p163 = scmp.eq.s32.totalorder %s18, 7
    %p164 = por %p162, %p163
    %p165 = scmp.ne.s32.totalorder %s156, %s157
    %p166 = scmp.eq.s32.totalorder %s18, 0
    %p167 = por %p165, %p166
    %p168 = scmp.ne.s32.totalorder %s156, %s157
    %p169 = scmp.eq.s32.totalorder %s19, 7
    %p170 = por %p168, %p169
    %p172 = scmp.ne.s32.totalorder %s157, %s171
    %p173 = scmp.eq.s32.totalorder %s19, 0
    %p174 = por %p172, %p173
    %s176 = sadd.s32 %s175, 1
    %p179 = scmp.eq.s32.totalorder %s13, 7
    %p180 = scmp.ne.s32.totalorder %s175, %s177
    %p181 = scmp.eq.s32.totalorder %s13, 0
    %p182 = por %p180, %p181
    %p183 = scmp.ne.s32.totalorder %s175, %s177
    %p184 = scmp.eq.s32.totalorder %s18, 7
    %p185 = por %p183, %p184
    %p186 = scmp.ne.s32.totalorder %s177, %s178
    %p187 = scmp.eq.s32.totalorder %s18, 0
    %p188 = por %p186, %p187
    %p189 = scmp.ne.s32.totalorder %s177, %s178
    %p190 = scmp.eq.s32.totalorder %s19, 7
    %p191 = por %p189, %p190
    %p193 = scmp.ne.s32.totalorder %s178, %s192
    %p194 = scmp.eq.s32.totalorder %s19, 0
    %p195 = por %p193, %p194
    %s197 = sadd.s32 %s196, 1
    %p200 = scmp.eq.s32.totalorder %s13, 7
    %p201 = scmp.ne.s32.totalorder %s196, %s198
    %p202 = scmp.eq.s32.totalorder %s13, 0
    %p203 = por %p201, %p202
    %p204 = scmp.ne.s32.totalorder %s196, %s198
    %p205 = scmp.eq.s32.totalorder %s18, 7
    %p206 = por %p204, %p205
    %p207 = scmp.ne.s32.totalorder %s198, %s199
    %p208 = scmp.eq.s32.totalorder %s18, 0
    %p209 = por %p207, %p208
    %p210 = scmp.ne.s32.totalorder %s198, %s199
    %p211 = scmp.eq.s32.totalorder %s19, 7
    %p212 = por %p210, %p211
    %p214 = scmp.ne.s32.totalorder %s199, %s213
    %p215 = scmp.eq.s32.totalorder %s19, 0
    %p216 = por %p214, %p215
    %s217 = ssub.s32 %s21, %s28
    %s218 = ssub.s32 %s20, %s32
    %s219 = sor.u32 %s217, %s218
    %p220 = scmp.eq.s32.totalorder %s219, 0
    %s222 = sadd.s32 %s221, 1
    %s223 = scalar_select %p220, %s221, %s222
    %p226 = pneg %p220
    %p227 = scmp.eq.s32.totalorder %s13, 7
    %p228 = por %p226, %p227
    %p229 = scmp.ne.s32.totalorder %s221, %s224
    %p230 = scmp.eq.s32.totalorder %s13, 0
    %p231 = por %p229, %p230
    %p232 = scmp.ne.s32.totalorder %s221, %s224
    %p233 = scmp.eq.s32.totalorder %s18, 7
    %p234 = por %p232, %p233
    %p235 = scmp.ne.s32.totalorder %s224, %s225
    %p236 = scmp.eq.s32.totalorder %s18, 0
    %p237 = por %p235, %p236
    %p238 = scmp.ne.s32.totalorder %s224, %s225
    %p239 = scmp.eq.s32.totalorder %s19, 7
    %p240 = por %p238, %p239
    %p242 = scmp.ne.s32.totalorder %s225, %s241
    %p243 = scmp.eq.s32.totalorder %s19, 0
    %p244 = por %p242, %p243
    %p245 = scmp.le.s32.totalorder 1, %s13
    %p246 = scmp.lt.s32.totalorder %s13, 9
    %p247 = pnand %p245, %p246
    %p248 = pneg %p247
    // Predicated region
    $region9: #{_lambda_.3} parent=5 // pred_check
      _
    $region10: #{_lambda_.3} parent=5 // pred_check_branch
      %250 = sbr.rel (%p247) target = $region12
    $region11: #{_lambda_.3} parent=5 // pred_region
      %s251 = ssub.s32 %s13, 1
      // Predicated region
      $region13: #{_lambda_.3} parent=11 // pred_check
        %p252 = pneg %p146
      $region14: #{_lambda_.3} parent=11 // pred_check_branch
        %254 = sbr.rel (%p252) target = $region16
      $region15: #{_lambda_.3} parent=11 // pred_region
        _
      $region16: #{_lambda_.3} parent=11 // pred_fallthru
        _
      // Predicated region
      $region17: #{_lambda_.3} parent=11 // pred_check
        %p255 = pneg %p167
      $region18: #{_lambda_.3} parent=11 // pred_check_branch
        %257 = sbr.rel (%p255) target = $region20
      $region19: #{_lambda_.3} parent=11 // pred_region
        _
      $region20: #{_lambda_.3} parent=11 // pred_fallthru
        _
      // Predicated region
      $region21: #{_lambda_.3} parent=11 // pred_check
        %p258 = pneg %p188
      $region22: #{_lambda_.3} parent=11 // pred_check_branch
        %260 = sbr.rel (%p258) target = $region24
      $region23: #{_lambda_.3} parent=11 // pred_region
        _
      $region24: #{_lambda_.3} parent=11 // pred_fallthru
        _
      // Predicated region
      $region25: #{_lambda_.3} parent=11 // pred_check
        %p261 = pneg %p209
      $region26: #{_lambda_.3} parent=11 // pred_check_branch
        %263 = sbr.rel (%p261) target = $region28
      $region27: #{_lambda_.3} parent=11 // pred_region
        _
      $region28: #{_lambda_.3} parent=11 // pred_fallthru
        _
    $region12: #{_lambda_.3} parent=5 // pred_fallthru
      _
    %p264 = scmp.lt.s32.totalorder %s13, 8
    // Predicated region
    $region29: #{_lambda_.3} parent=5 // pred_check
      %p265 = pneg %p264
    $region30: #{_lambda_.3} parent=5 // pred_check_branch
      %267 = sbr.rel (%p265) target = $region32
    $region31: #{_lambda_.3} parent=5 // pred_region
      // Predicated region
      $region33: #{_lambda_.3} parent=31 // pred_check
        %p268 = pneg %p55
      $region34: #{_lambda_.3} parent=31 // pred_check_branch
        %270 = sbr.rel (%p268) target = $region36
      $region35: #{_lambda_.3} parent=31 // pred_region
        %s271 = smul.u32 %s20, 4
        %s272 = ssub.s32 %s271, 1
        %p273 = scmp.gt.s32.totalorder %s272, 0
        %s274 = scalar_select %p273, %s272, 0
        %p275 = scmp.lt.s32.totalorder %s21, 1
        %s276 = scalar_select %p275, %s21, 1
        %p277 = scmp.lt.s32.totalorder %s274, 15
        %s278 = scalar_select %p277, %s274, 15
        %s279 = smul.addr %s276, 16
        %s280 = sadd.s32 %s278, %s279
        %s281 = smul.addr %s280, 8
        %s282 = scalar_lea.vmem %s0, %s281
        %s283 = smul.u32 %s20, 4
        %s284 = ssub.s32 %s283, 1
        %p285 = scmp.gt.s32.totalorder %s284, 0
        %s286 = scalar_select %p285, %s284, 0
      $region36: #{_lambda_.3} parent=31 // pred_fallthru
        _
      // Predicated region
      $region37: #{_lambda_.3} parent=31 // pred_check
        %p287 = pneg %p83
      $region38: #{_lambda_.3} parent=31 // pred_check_branch
        %289 = sbr.rel (%p287) target = $region40
      $region39: #{_lambda_.3} parent=31 // pred_region
        %s290 = smul.u32 4, %s20
        %p291 = scmp.lt.s32.totalorder %s21, 1
        %s292 = scalar_select %p291, %s21, 1
        %p293 = scmp.lt.s32.totalorder %s290, 15
        %s294 = scalar_select %p293, %s290, 15
        %s295 = smul.addr %s292, 16
        %s296 = sadd.s32 %s294, %s295
        %s297 = smul.addr %s296, 8
        %s298 = scalar_lea.vmem %s1, %s297
        %s299 = smul.u32 4, %s20
      $region40: #{_lambda_.3} parent=31 // pred_fallthru
        _
      // Predicated region
      $region41: #{_lambda_.3} parent=31 // pred_check
        %p300 = pneg %p119
      $region42: #{_lambda_.3} parent=31 // pred_check_branch
        %302 = sbr.rel (%p300) target = $region44
      $region43: #{_lambda_.3} parent=31 // pred_region
        %s303 = sadd.s32 %s20, 1
        %s304 = smul.u32 %s303, 4
        %p305 = scmp.lt.s32.totalorder %s304, 15
        %s306 = scalar_select %p305, %s304, 15
        %p307 = scmp.lt.s32.totalorder %s21, 1
        %s308 = scalar_select %p307, %s21, 1
        %p309 = scmp.lt.s32.totalorder %s306, 15
        %s310 = scalar_select %p309, %s306, 15
        %s311 = smul.addr %s308, 16
        %s312 = sadd.s32 %s310, %s311
        %s313 = smul.addr %s312, 8
        %s314 = scalar_lea.vmem %s2, %s313
        %s315 = sadd.s32 %s20, 1
        %s316 = smul.u32 %s315, 4
        %p317 = scmp.lt.s32.totalorder %s316, 15
        %s318 = scalar_select %p317, %s316, 15
      $region44: #{_lambda_.3} parent=31 // pred_fallthru
        _
    $region32: #{_lambda_.3} parent=5 // pred_fallthru
      _
    %p319 = scmp.le.s32.totalorder 1, %s13
    %p320 = scmp.lt.s32.totalorder %s13, 9
    %p321 = pnand %p319, %p320
    %p322 = pneg %p321
    // Predicated region
    $region45: #{_lambda_.3} parent=5 // pred_check
      _
    $region46: #{_lambda_.3} parent=5 // pred_check_branch
      %324 = sbr.rel (%p321) target = $region48
    $region47: #{_lambda_.3} parent=5 // pred_region
      %s325 = ssub.s32 %s13, 1
      %s326 = smul.u32 %s22, 4
      %s327 = ssub.s32 %s326, 1
      %p328 = scmp.gt.s32.totalorder %s327, 0
      %s329 = scalar_select %p328, %s327, 0
      %p330 = scmp.lt.s32.totalorder %s23, 1
      %s331 = scalar_select %p330, %s23, 1
      %p332 = scmp.lt.s32.totalorder %s329, 15
      %s333 = scalar_select %p332, %s329, 15
      %s334 = smul.addr %s331, 16
      %s335 = sadd.s32 %s333, %s334
      %s336 = smul.addr %s335, 8
      %s337 = scalar_lea.vmem %s0, %s336
      %p338 = pneg %p61
      %p339 = pneg %p58
      %s340 = smul.u32 4, %s22
      %p341 = scmp.lt.s32.totalorder %s23, 1
      %s342 = scalar_select %p341, %s23, 1
      %p343 = scmp.lt.s32.totalorder %s340, 15
      %s344 = scalar_select %p343, %s340, 15
      %s345 = smul.addr %s342, 16
      %s346 = sadd.s32 %s344, %s345
      %s347 = smul.addr %s346, 8
      %s348 = scalar_lea.vmem %s1, %s347
      %p349 = pneg %p89
      %p350 = pneg %p86
      %s351 = sadd.s32 %s22, 1
      %s352 = smul.u32 %s351, 4
      %p353 = scmp.lt.s32.totalorder %s352, 15
      %s354 = scalar_select %p353, %s352, 15
      %p355 = scmp.lt.s32.totalorder %s23, 1
      %s356 = scalar_select %p355, %s23, 1
      %p357 = scmp.lt.s32.totalorder %s354, 15
      %s358 = scalar_select %p357, %s354, 15
      %s359 = smul.addr %s356, 16
      %s360 = sadd.s32 %s358, %s359
      %s361 = smul.addr %s360, 8
      %s362 = scalar_lea.vmem %s2, %s361
      %p363 = pneg %p125
      %p364 = pneg %p122
      %p365 = pneg %p146
      %p366 = pneg %p143
      %p367 = pneg %p167
      %p368 = pneg %p164
      %p369 = pneg %p188
      %p370 = pneg %p185
      %p371 = pneg %p209
      %p372 = pneg %p206
      %p373 = pneg %p237
      %p374 = pneg %p234
      %s375 = smul.u32 4, %s22
      %p376 = scmp.lt.s32.totalorder %s23, 1
      %s377 = scalar_select %p376, %s23, 1
      %p378 = scmp.lt.s32.totalorder %s375, 15
      %s379 = scalar_select %p378, %s375, 15
      %s380 = smul.addr %s377, 16
      %s381 = sadd.s32 %s379, %s380
      %s382 = smul.addr %s381, 8
      %s383 = scalar_lea.vmem %s7, %s382
      %s384 = smul.u32 %s22, 4
      %s385 = ssub.s32 %s384, 1
      %p386 = scmp.gt.s32.totalorder %s385, 0
      %s387 = scalar_select %p386, %s385, 0
      %p388 = scmp.lt.s32.totalorder %s23, 1
      %s389 = scalar_select %p388, %s23, 1
      %p390 = scmp.lt.s32.totalorder %s387, 15
      %s391 = scalar_select %p390, %s387, 15
      %s392 = smul.addr %s389, 16
      %s393 = sadd.s32 %s391, %s392
      %s394 = smul.addr %s393, 8
      %s395 = scalar_lea.vmem %s0, %s394
      %s396 = smul.u32 %s22, 4
      %s397 = ssub.s32 %s396, 1
      %p398 = scmp.gt.s32.totalorder %s397, 0
      %s399 = scalar_select %p398, %s397, 0
      %s400 = smul.u32 4, %s22
      %p401 = scmp.lt.s32.totalorder %s23, 1
      %s402 = scalar_select %p401, %s23, 1
      %p403 = scmp.lt.s32.totalorder %s400, 15
      %s404 = scalar_select %p403, %s400, 15
      %s405 = smul.addr %s402, 16
      %s406 = sadd.s32 %s404, %s405
      %s407 = smul.addr %s406, 8
      %s408 = scalar_lea.vmem %s1, %s407
      %s409 = smul.u32 4, %s22
      %s410 = sadd.s32 %s22, 1
      %s411 = smul.u32 %s410, 4
      %p412 = scmp.lt.s32.totalorder %s411, 15
      %s413 = scalar_select %p412, %s411, 15
      %p414 = scmp.lt.s32.totalorder %s23, 1
      %s415 = scalar_select %p414, %s23, 1
      %p416 = scmp.lt.s32.totalorder %s413, 15
      %s417 = scalar_select %p416, %s413, 15
      %s418 = smul.addr %s415, 16
      %s419 = sadd.s32 %s417, %s418
      %s420 = smul.addr %s419, 8
      %s421 = scalar_lea.vmem %s2, %s420
      %s422 = sadd.s32 %s22, 1
      %s423 = smul.u32 %s422, 4
      %p424 = scmp.lt.s32.totalorder %s423, 15
      %s425 = scalar_select %p424, %s423, 15
      %s426 = smul.u32 4, %s22
      %p427 = scmp.lt.s32.totalorder %s23, 1
      %s428 = scalar_select %p427, %s23, 1
      %p429 = scmp.lt.s32.totalorder %s426, 15
      %s430 = scalar_select %p429, %s426, 15
      %s431 = smul.addr %s428, 16
      %s432 = sadd.s32 %s430, %s431
      %s433 = smul.addr %s432, 8
      %s434 = scalar_lea.vmem %s7, %s433
      %s435 = smul.u32 4, %s22
      %v436 = vld [vmem:[%s395] sm:$0xff]
      %v437 = vld [vmem:[%s408] sm:$0xff]
      %v438 = vld [vmem:[%s408 + $0x8] sm:$0xff]
      %v439 = vld [vmem:[%s408 + $0x10] sm:$0xff]
      %v440 = vld [vmem:[%s408 + $0x18] sm:$0xff]
      %v441 = vld [vmem:[%s421] sm:$0xff]
      %p442 = scmp.eq.s32.totalorder %s22, 0
      %s443 = scalar_select %p442, 0.0, 1.0
      %v444 = vstv %s443
      %v445 = vmul.f32 %v436, %v444
      %p446 = scmp.eq.s32.totalorder %s22, 3
      %s447 = scalar_select %p446, 0.0, 1.0
      %v448 = vstv %s447
      %v449 = vmul.f32 %v441, %v448
      %vm454 = vcmask 1044480
      %v455 = vrot.slane %v437, 3
      %v456 = vrot.slane %v438, 3
      %v457 = vsel %vm454, %v455, %v456
      %v458 = vrot.slane %v439, 3
      %v459 = vsel %vm454, %v456, %v458
      %v460 = vrot.slane %v440, 3
      %v461 = vsel %vm454, %v458, %v460
      %462 = vrot.lane.b32.xlu0 %v455, 16
      %v463 = vpop.permute.xlu0 %462
      %464 = vrot.lane.b32.xlu0 %v457, 16
      %v465 = vpop.permute.xlu0 %464
      %466 = vrot.lane.b32.xlu0 %v459, 16
      %v467 = vpop.permute.xlu0 %466
      %468 = vrot.lane.b32.xlu0 %v461, 16
      %v469 = vpop.permute.xlu0 %468
      %470 = vrot.lane.b32.xlu0 %v460, 16
      %v471 = vpop.permute.xlu0 %470
      %vm478 = vcmask 1041408
      %v479 = vrot.slane %v437, 6
      %v480 = vrot.slane %v438, 6
      %v481 = vsel %vm478, %v479, %v480
      %v482 = vrot.slane %v439, 6
      %v483 = vsel %vm478, %v480, %v482
      %v484 = vrot.slane %v440, 6
      %v485 = vsel %vm478, %v482, %v484
      %v486 = vrot.slane %v449, 6
      %v487 = vsel %vm478, %v484, %v486
      %488 = vrot.lane.b32.xlu0 %v479, 32
      %v489 = vpop.permute.xlu0 %488
      %490 = vrot.lane.b32.xlu0 %v481, 32
      %v491 = vpop.permute.xlu0 %490
      %492 = vrot.lane.b32.xlu0 %v483, 32
      %v493 = vpop.permute.xlu0 %492
      %494 = vrot.lane.b32.xlu0 %v485, 32
      %v495 = vpop.permute.xlu0 %494
      %496 = vrot.lane.b32.xlu0 %v487, 32
      %v497 = vpop.permute.xlu0 %496
      %vm503 = vcmask 130048
      %v504 = vsel %vm503, %v445, %v463
      %v505 = vsel %vm503, %v437, %v465
      %v506 = vsel %vm503, %v438, %v467
      %v507 = vsel %vm503, %v439, %v469
      %v508 = vsel %vm503, %v440, %v471
      %vm509 = vcmask 261120
      %v510 = vsel %vm509, %v504, %v489
      %v511 = vsel %vm509, %v505, %v491
      %v512 = vsel %vm509, %v506, %v493
      %v513 = vsel %vm509, %v507, %v495
      %v514 = vsel %vm509, %v508, %v497
      %v515 = vld [vmem:[%s3] sm:$0xff]
      %v516 = vld [vmem:[%s3 + $0x8] sm:$0xff]
      %v517 = vld [vmem:[%s3 + $0x10] sm:$0xff]
      %v518 = vld [vmem:[%s3 + $0x18] sm:$0xff]
      %v519 = vld [vmem:[%s3 + $0x20] sm:$0xff]
      %v520 = vld [vmem:[%s3 + $0x28] sm:$0xff]
      %v521 = vld [vmem:[%s4] sm:$0x1]
      %v523 = vlaneseq
      %v524 = vshrl.u32 %v523, 7
      %v525 = vsub.s32 0, %v524
      %v526 = vrot.slane %v521, %v525
      %vm533 = vcmask 1042432
      %v534 = vrot.slane %v510, 5
      %v535 = vrot.slane %v511, 5
      %v536 = vsel %vm533, %v534, %v535
      %v537 = vrot.slane %v512, 5
      %v538 = vsel %vm533, %v535, %v537
      %v539 = vrot.slane %v513, 5
      %v540 = vsel %vm533, %v537, %v539
      %v541 = vrot.slane %v514, 5
      %v542 = vsel %vm533, %v539, %v541
      %vm543 = vcmask 392192
      %v544 = vsel %vm543, %v536, 0
      %v546 = vsel %vm543, %v538, 0
      %v548 = vsel %vm543, %v540, 0
      %v550 = vsel %vm543, %v542, 0
      %552 = vmatprep.subr.mxu0 0.0
      %553 = vmatpush1.msra.mxu0 %v515
      %554 = vmatprep.subr.mxu0 0.0
      %555 = vmatpush1.msra.mxu0 %v516
      %556 = vmatprep.subr.mxu0 0.0
      %557 = vmatpush1.msra.mxu0 %v517
      %558 = vmatprep.subr.mxu0 0.0
      %559 = vmatpush1.msra.mxu0 %v518
      %560 = vmatprep.subr.mxu0 0.0
      %561 = vmatpush1.msra.mxu0 %v519
      %562 = vmatprep.subr.mxu0 0.0
      %563 = vmatpush1.msra.mxu0 %v520
      %564 = vmatprep.subr.mxu0 0.0
      %565 = vmatpush1.msra.mxu0 0.0
      %566 = vmatprep.subr.mxu0 0.0
      %567 = vmatpush1.msra.mxu0 0.0
      %568 = vmatprep.subr.mxu0 0.0
      %569 = vmatpush1.msra.mxu0 0.0
      %570 = vmatprep.subr.mxu0 0.0
      %571 = vmatpush1.msra.mxu0 0.0
      %572 = vmatprep.subr.mxu0 0.0
      %573 = vmatpush1.msra.mxu0 0.0
      %574 = vmatprep.subr.mxu0 0.0
      %575 = vmatpush1.msra.mxu0 0.0
      %576 = vmatprep.subr.mxu0 0.0
      %577 = vmatpush1.msra.mxu0 0.0
      %578 = vmatprep.subr.mxu0 0.0
      %579 = vmatpush1.msra.mxu0 0.0
      %580 = vmatprep.subr.mxu0 0.0
      %581 = vmatpush1.msra.mxu0 0.0
      %582 = vmatprep.subr.mxu0 0.0
      %583 = vmatpush1.msra.mxu0 0.0
      %584 = vmatprep.subr.mxu0 0.0
      %585 = vmatpush1.msra.mxu0 0.0
      %586 = vmatprep.subr.mxu0 0.0
      %587 = vmatpush1.msra.mxu0 0.0
      %588 = vmatprep.subr.mxu0 0.0
      %589 = vmatpush1.msra.mxu0 0.0
      %590 = vmatprep.subr.mxu0 0.0
      %591 = vmatpush1.msra.mxu0 0.0
      %592 = vmatprep.subr.mxu0 0.0
      %593 = vmatpush1.msra.mxu0 0.0
      %594 = vmatprep.subr.mxu0 0.0
      %595 = vmatpush1.msra.mxu0 0.0
      %596 = vmatprep.subr.mxu0 0.0
      %597 = vmatpush1.msra.mxu0 0.0
      %598 = vmatprep.subr.mxu0 0.0
      %599 = vmatpush1.msra.mxu0 0.0
      %600 = vmatprep.subr.mxu0 0.0
      %601 = vmatpush1.msra.mxu0 0.0
      %602 = vmatprep.subr.mxu0 0.0
      %603 = vmatpush1.msra.mxu0 0.0
      %604 = vmatprep.subr.mxu0 0.0
      %605 = vmatpush1.msra.mxu0 0.0
      %606 = vmatprep.subr.mxu0 0.0
      %607 = vmatpush1.msra.mxu0 0.0
      %608 = vmatprep.subr.mxu0 0.0
      %609 = vmatpush1.msra.mxu0 0.0
      %610 = vmatprep.subr.mxu0 0.0
      %611 = vmatpush1.msra.mxu0 0.0
      %612 = vmatprep.subr.mxu0 0.0
      %613 = vmatpush1.msra.mxu0 0.0
      %614 = vmatprep.subr.mxu0 0.0
      %615 = vmatpush1.msra.mxu0 0.0
      %616 = vmatprep.mubr.f32.mxu0 0.0
      %617 = vmatmul.mubr.f32.gmra.mrb[0].mxu0 %v544
      %v618 = vpop.f32.mrb[0].mxu0
      %v619 = vadd.f32 %v526, %v618
      %v620 = vpop.f32.mrb[0].mxu0
      %621 = vmatprep.mubr.f32.mxu0 0.0
      %622 = vmatmul.mubr.f32.gmra.mrb[0].mxu0 %v546
      %v623 = vpop.f32.mrb[0].mxu0
      %v624 = vadd.f32 %v526, %v623
      %v625 = vpop.f32.mrb[0].mxu0
      %626 = vmatprep.mubr.f32.mxu0 0.0
      %627 = vmatmul.mubr.f32.gmra.mrb[0].mxu0 %v548
      %v628 = vpop.f32.mrb[0].mxu0
      %v629 = vadd.f32 %v526, %v628
      %v630 = vpop.f32.mrb[0].mxu0
      %631 = vmatprep.mubr.f32.mxu0 0.0
      %632 = vmatmul.mubr.f32.gmra.mrb[0].mxu0 %v550
      %v633 = vpop.f32.mrb[0].mxu0
      %v634 = vadd.f32 %v526, %v633
      %v635 = vpop.f32.mrb[0].mxu0
      %636 = vdwg.mxu0
      %vm637 = vcmp.ge.f32.partialorder %v619, 0.0
      %vm638 = vcmp.ge.f32.partialorder %v624, 0.0
      %vm639 = vcmp.ge.f32.partialorder %v629, 0.0
      %vm640 = vcmp.ge.f32.partialorder %v634, 0.0
      %v641 = vmul.f32 %v619, 0.01
      %v642 = vmul.f32 %v624, 0.01
      %v643 = vmul.f32 %v629, 0.01
      %v644 = vmul.f32 %v634, 0.01
      %v645 = vsel %vm637, %v619, %v641
      %v646 = vsel %vm638, %v624, %v642
      %v647 = vsel %vm639, %v629, %v643
      %v648 = vsel %vm640, %v634, %v644
      %v649 = vld [vmem:[%s5] sm:$0xff]
      %v650 = vld [vmem:[%s5 + $0x8] sm:$0xff]
      %v651 = vld [vmem:[%s6] sm:$0x1]
      %v653 = vlaneseq
      %v654 = vshrl.u32 %v653, 7
      %v655 = vsub.s32 0, %v654
      %v656 = vrot.slane %v651, %v655
      %v659 = vsel %vm503, %v645, 0
      %v662 = vsel %vm503, %v646, 0
      %v665 = vsel %vm503, %v647, 0
      %v668 = vsel %vm503, %v648, 0
      %670 = vmatprep.subr.mxu0 0.0
      %671 = vmatpush1.msra.mxu0 %v649
      %672 = vmatprep.subr.mxu0 0.0
      %673 = vmatpush1.msra.mxu0 %v650
      %674 = vmatprep.subr.mxu0 0.0
      %675 = vmatpush1.msra.mxu0 0.0
      %676 = vmatprep.subr.mxu0 0.0
      %677 = vmatpush1.msra.mxu0 0.0
      %678 = vmatprep.subr.mxu0 0.0
      %679 = vmatpush1.msra.mxu0 0.0
      %680 = vmatprep.subr.mxu0 0.0
      %681 = vmatpush1.msra.mxu0 0.0
      %682 = vmatprep.subr.mxu0 0.0
      %683 = vmatpush1.msra.mxu0 0.0
      %684 = vmatprep.subr.mxu0 0.0
      %685 = vmatpush1.msra.mxu0 0.0
      %686 = vmatprep.subr.mxu0 0.0
      %687 = vmatpush1.msra.mxu0 0.0
      %688 = vmatprep.subr.mxu0 0.0
      %689 = vmatpush1.msra.mxu0 0.0
      %690 = vmatprep.subr.mxu0 0.0
      %691 = vmatpush1.msra.mxu0 0.0
      %692 = vmatprep.subr.mxu0 0.0
      %693 = vmatpush1.msra.mxu0 0.0
      %694 = vmatprep.subr.mxu0 0.0
      %695 = vmatpush1.msra.mxu0 0.0
      %696 = vmatprep.subr.mxu0 0.0
      %697 = vmatpush1.msra.mxu0 0.0
      %698 = vmatprep.subr.mxu0 0.0
      %699 = vmatpush1.msra.mxu0 0.0
      %700 = vmatprep.subr.mxu0 0.0
      %701 = vmatpush1.msra.mxu0 0.0
      %702 = vmatprep.subr.mxu0 0.0
      %703 = vmatpush1.msra.mxu0 0.0
      %704 = vmatprep.subr.mxu0 0.0
      %705 = vmatpush1.msra.mxu0 0.0
      %706 = vmatprep.subr.mxu0 0.0
      %707 = vmatpush1.msra.mxu0 0.0
      %708 = vmatprep.subr.mxu0 0.0
      %709 = vmatpush1.msra.mxu0 0.0
      %710 = vmatprep.subr.mxu0 0.0
      %711 = vmatpush1.msra.mxu0 0.0
      %712 = vmatprep.subr.mxu0 0.0
      %713 = vmatpush1.msra.mxu0 0.0
      %714 = vmatprep.subr.mxu0 0.0
      %715 = vmatpush1.msra.mxu0 0.0
      %716 = vmatprep.subr.mxu0 0.0
      %717 = vmatpush1.msra.mxu0 0.0
      %718 = vmatprep.subr.mxu0 0.0
      %719 = vmatpush1.msra.mxu0 0.0
      %720 = vmatprep.subr.mxu0 0.0
      %721 = vmatpush1.msra.mxu0 0.0
      %722 = vmatprep.subr.mxu0 0.0
      %723 = vmatpush1.msra.mxu0 0.0
      %724 = vmatprep.subr.mxu0 0.0
      %725 = vmatpush1.msra.mxu0 0.0
      %726 = vmatprep.subr.mxu0 0.0
      %727 = vmatpush1.msra.mxu0 0.0
      %728 = vmatprep.subr.mxu0 0.0
      %729 = vmatpush1.msra.mxu0 0.0
      %730 = vmatprep.subr.mxu0 0.0
      %731 = vmatpush1.msra.mxu0 0.0
      %732 = vmatprep.subr.mxu0 0.0
      %733 = vmatpush1.msra.mxu0 0.0
      %734 = vmatprep.mubr.f32.mxu0 0.0
      %735 = vmatmul.mubr.f32.gmra.mrb[0].mxu0 %v659
      %v736 = vpop.f32.mrb[0].mxu0
      %v737 = vadd.f32 %v656, %v736
      %v738 = vpop.f32.mrb[0].mxu0
      %739 = vmatprep.mubr.f32.mxu0 0.0
      %740 = vmatmul.mubr.f32.gmra.mrb[0].mxu0 %v662
      %v741 = vpop.f32.mrb[0].mxu0
      %v742 = vadd.f32 %v656, %v741
      %v743 = vpop.f32.mrb[0].mxu0
      %744 = vmatprep.mubr.f32.mxu0 0.0
      %745 = vmatmul.mubr.f32.gmra.mrb[0].mxu0 %v665
      %v746 = vpop.f32.mrb[0].mxu0
      %v747 = vadd.f32 %v656, %v746
      %v748 = vpop.f32.mrb[0].mxu0
      %749 = vmatprep.mubr.f32.mxu0 0.0
      %750 = vmatmul.mubr.f32.gmra.mrb[0].mxu0 %v668
      %v751 = vpop.f32.mrb[0].mxu0
      %v752 = vadd.f32 %v656, %v751
      %v753 = vpop.f32.mrb[0].mxu0
      %754 = vdwg.mxu0
      %vm755 = vcmp.ge.f32.partialorder %v737, 0.0
      %vm756 = vcmp.ge.f32.partialorder %v742, 0.0
      %vm757 = vcmp.ge.f32.partialorder %v747, 0.0
      %vm758 = vcmp.ge.f32.partialorder %v752, 0.0
      %v759 = vmul.f32 %v737, 0.01
      %v760 = vmul.f32 %v742, 0.01
      %v761 = vmul.f32 %v747, 0.01
      %v762 = vmul.f32 %v752, 0.01
      %v763 = vsel %vm755, %v737, %v759
      %v764 = vsel %vm756, %v742, %v760
      %v765 = vsel %vm757, %v747, %v761
      %v766 = vsel %vm758, %v752, %v762
      %v767 = vadd.f32 %v437, %v763
      %v768 = vadd.f32 %v438, %v764
      %v769 = vadd.f32 %v439, %v765
      %v770 = vadd.f32 %v440, %v766
      %s771 = smul.u32 %s22, 32
      %v772 = vlaneseq
      %v773 = vshrl.u32 %v772, 7
      %v774 = vadd.s32 %v773, 8
      %v775 = vadd.s32 %v773, 16
      %v776 = vadd.s32 %v773, 24
      %v777 = vstv %s771
      %v778 = vadd.s32 %v777, %v773
      %v779 = vadd.s32 %v777, %v774
      %v780 = vadd.s32 %v777, %v775
      %v781 = vadd.s32 %v777, %v776
      %vm782 = vcmp.lt.s32.totalorder %v778, 100
      %vm783 = vcmp.lt.s32.totalorder %v779, 100
      %vm784 = vcmp.lt.s32.totalorder %v780, 100
      %vm785 = vcmp.lt.s32.totalorder %v781, 100
      %v786 = vsel %vm782, %v767, 0.0
      %v787 = vsel %vm783, %v768, 0.0
      %v788 = vsel %vm784, %v769, 0.0
      %v789 = vsel %vm785, %v770, 0.0
      %790 = vst.msk [vmem:[%s434] sm:$0xff] %vm503, %v786
      %791 = vst.msk [vmem:[%s434 + $0x8] sm:$0xff] %vm503, %v787
      %792 = vst.msk [vmem:[%s434 + $0x10] sm:$0xff] %vm503, %v788
      %793 = vst.msk [vmem:[%s434 + $0x18] sm:$0xff] %vm503, %v789
      %s794 = smul.u32 4, %s22
      %p795 = scmp.lt.s32.totalorder %s23, 1
      %s796 = scalar_select %p795, %s23, 1
      %p797 = scmp.lt.s32.totalorder %s794, 15
      %s798 = scalar_select %p797, %s794, 15
      %s799 = smul.addr %s796, 16
      %s800 = sadd.s32 %s798, %s799
      %s801 = smul.addr %s800, 8
      %s802 = scalar_lea.vmem %s7, %s801
      // Predicated region
      $region49: #{_lambda_.3} parent=47 // pred_check
        %p803 = pneg %p234
      $region50: #{_lambda_.3} parent=47 // pred_check_branch
        %805 = sbr.rel (%p803) target = $region52
      $region51: #{_lambda_.3} parent=47 // pred_region
        %s806 = smul.u32 4, %s22
      $region52: #{_lambda_.3} parent=47 // pred_fallthru
        _
    $region48: #{_lambda_.3} parent=5 // pred_fallthru
      _
    %p807 = scmp.le.s32.totalorder 2, %s13
    // Predicated region
    $region53: #{_lambda_.3} parent=5 // pred_check
      %p808 = pneg %p807
    $region54: #{_lambda_.3} parent=5 // pred_check_branch
      %810 = sbr.rel (%p808) target = $region56
    $region55: #{_lambda_.3} parent=5 // pred_region
      %s811 = ssub.s32 %s13, 2
      // Predicated region
      $region57: #{_lambda_.3} parent=55 // pred_check
        %p812 = pneg %p240
      $region58: #{_lambda_.3} parent=55 // pred_check_branch
        %814 = sbr.rel (%p812) target = $region60
      $region59: #{_lambda_.3} parent=55 // pred_region
        %s815 = smul.u32 4, %s24
        %p816 = scmp.lt.s32.totalorder %s25, 1
        %s817 = scalar_select %p816, %s25, 1
        %p818 = scmp.lt.s32.totalorder %s815, 15
        %s819 = scalar_select %p818, %s815, 15
        %s820 = smul.addr %s817, 16
        %s821 = sadd.s32 %s819, %s820
        %s822 = smul.addr %s821, 8
        %s823 = scalar_lea.vmem %s7, %s822
      $region60: #{_lambda_.3} parent=55 // pred_fallthru
        _
    $region56: #{_lambda_.3} parent=5 // pred_fallthru
      _
  $region6: #{_lambda_.3} parent=0 // loop_footer
    %s17 = sadd.s32 1, %s13
  $region7: #{_lambda_.3} parent=0 // loop_footer_branch
    %12 = sbr.rel target = $region3
  $region8: #{_lambda_.3} parent=0 // loop_exit
    _

</llo_original>
